<compile_context>
chip_gen: v5e
topology: v5e:2x2
jax: 0.10.0
libtpu: 0.0.40
codegen_flags: <defaults>
</compile_context>

<pallas_src>
import math
import functools

import jax
import jax.numpy as jnp
from jax.experimental import pallas as pl
from jax.experimental.pallas import tpu as pltpu


# ----------------------------- Pallas kernel ------------------------------

def _gp_apply_kernel(m_ref, y_ref, z_ref):
    """Per (batch, N-tile) program: Z_tile = relu(M @ Y_tile)."""
    m = m_ref[0]                                   # (l, l)  float32
    y = y_ref[0]                                   # (l, tn) native dtype
    # MXU matmul, f32 accumulate.  l is tiny (pads to the MXU dim) but the
    # kernel is HBM-bound, so MXU shape/utilization is irrelevant by design.
    z = jnp.dot(m, y.astype(jnp.float32), preferred_element_type=jnp.float32)
    z_ref[0] = jnp.maximum(z, 0.0).astype(z_ref.dtype)   # ReLU + cast (VPU)


def _vmem_capacity_bytes():
    """Physical VMEM per TensorCore; conservative fallback is v7x (64 MiB)."""
    try:
        return int(pltpu.get_tpu_info().vmem_capacity_bytes)
    except Exception:
        return 64 << 20


def _choose_tn(b, l, N, in_bytes, out_bytes,
               *, target_block_bytes=4 << 20, cap=131072):
    """Pick the lane tile: ~4 MiB per (l, tn) block, multiple of 128, capped.

    If the batch axis is odd (or 1), force >= 2 tiles along N so v7x's second
    TensorCore is never idle (megacore shards the 'parallel' axes).
    """
    per_lane = l * max(in_bytes, out_bytes)
    n_ceil = pl.cdiv(N, 128) * 128
    tn = max(128, min(cap, target_block_bytes // per_lane))
    tn = (tn // 128) * 128
    tn = max(128, min(tn, n_ceil))
    if (b % 2 == 1) and pl.cdiv(N, tn) < 2 and n_ceil >= 256:
        tn = max(128, pl.cdiv(pl.cdiv(n_ceil, 2), 128) * 128)
    return tn


def gp_apply(M, Yf, *, tn=None, out_dtype=jnp.float32):
    """M: (b, l, l) f32, Yf: (b, l, N) any float dtype -> (b, l, N) out_dtype."""
    b, l, N = Yf.shape
    in_bytes = jnp.dtype(Yf.dtype).itemsize
    out_bytes = jnp.dtype(out_dtype).itemsize
    if tn is None:
        tn = _choose_tn(b, l, N, in_bytes, out_bytes)
    grid = (b, pl.cdiv(N, tn))   # partial tail block handled by Pallas masking

    # Double-buffered pipeline footprint (M + Y in, Z out) + headroom, clamped
    # under physical VMEM so the same code works on v5e/v6e (128 MiB) and
    # v7x (64 MiB/TC) without being stuck at v5e's 16 MiB default scoped limit.
    pipeline_bytes = 2 * (l * l * 4 + l * tn * in_bytes + l * tn * out_bytes)
    vmem_cap = _vmem_capacity_bytes()
    vmem_limit = int(min(vmem_cap - (8 << 20),
                         max(pipeline_bytes + (16 << 20), 32 << 20)))

    cost = pl.CostEstimate(
        flops=2 * b * l * l * N,
        bytes_accessed=b * l * N * (in_bytes + out_bytes) + b * l * l * 4,
        transcendentals=0,
    )

    return pl.pallas_call(
        _gp_apply_kernel,
        out_shape=jax.ShapeDtypeStruct((b, l, N), out_dtype),
        grid_spec=pltpu.PrefetchScalarGridSpec(
            num_scalar_prefetch=0,
            grid=grid,
            in_specs=[
                # M block index is constant across ni -> fetched once per batch.
                pl.BlockSpec((1, l, l), lambda bi, ni: (bi, 0, 0)),
                pl.BlockSpec((1, l, tn), lambda bi, ni: (bi, 0, ni)),
            ],
            out_specs=pl.BlockSpec((1, l, tn), lambda bi, ni: (bi, 0, ni)),
        ),
        compiler_params=pltpu.CompilerParams(
            dimension_semantics=("parallel", "parallel"),
            vmem_limit_bytes=vmem_limit),
        cost_estimate=cost,
    )(M, Yf)


# ------------------------------ GPlayer wrapper ----------------------------

def gplayer_forward(params, D, Y, *, tn=None, out_dtype=jnp.float32):
    """JAX/Pallas equivalent of GPlayer.forward.

    params: dict with 'gamma2', 'ell', 'sigma2', each shape (1,)
    D: (b, l, l) distance matrix
    Y: (b, l, c, h, w) stacked encoder outputs (any float dtype; no wrapper
       cast -- the big tensor is streamed to the kernel in its native dtype)
    returns Z: (b, l, c*h*w) in out_dtype (f32 by default, as in PyTorch).
    """
    b, l, c, h, w = Y.shape
    Yf = Y.reshape(b, l, -1)          # no dtype cast: avoids an extra HBM pass
    D = D.astype(jnp.float32)

    gamma2 = params["gamma2"].astype(jnp.float32)
    ell = params["ell"].astype(jnp.float32)
    sigma2 = params["sigma2"].astype(jnp.float32)

    s3 = math.sqrt(3.0)
    # Matern-3/2 kernel matrix (tiny: b x l x l) -- cheap glue in plain JAX.
    K = jnp.exp(gamma2) * (1.0 + s3 * D / jnp.exp(ell)) * jnp.exp(-s3 * D / jnp.exp(ell))
    I = jnp.eye(l, dtype=jnp.float32)[None]
    A = K + jnp.exp(sigma2) * I

    # Fold the two tiny l x l ops into M = K @ A^{-1}:  A and K are symmetric,
    # so M = (A^{-1} K)^T.  The heavy matmul over N = c*h*w columns plus the
    # ReLU run inside the Pallas kernel.
    # TODO(synk): A is SPD; a batched Cholesky solve would be cheaper and more
    # stable for ill-conditioned A (tiny exp(sigma2), near-duplicate views).
    # The l x l batched solve itself has no useful Pallas equivalent (negligible
    # FLOPs), so it stays in plain JAX.
    M = jnp.swapaxes(jnp.linalg.solve(A, K), -1, -2).astype(jnp.float32)

    return gp_apply(M, Yf, tn=tn, out_dtype=out_dtype)


def init_params(key):
    k1, k2, k3 = jax.random.split(key, 3)
    return {
        "gamma2": jax.random.normal(k1, (1,), jnp.float32),
        "ell": jax.random.normal(k2, (1,), jnp.float32),
        "sigma2": jax.random.normal(k3, (1,), jnp.float32),
    }


# ---------------------------------- main -----------------------------------

if __name__ == "__main__":
    key = jax.random.PRNGKey(0)
    kp, kd, ky = jax.random.split(key, 3)

    b, l, c, h, w = 2, 8, 4, 16, 16          # N = c*h*w = 1024

    params = init_params(kp)

    # Synthetic symmetric distance matrix with zero diagonal (pose distances).
    pts = jax.random.normal(kd, (b, l, 3), jnp.float32)
    D = jnp.sqrt(jnp.sum((pts[:, :, None, :] - pts[:, None, :, :]) ** 2, axis=-1) + 1e-12)
    D = D * (1.0 - jnp.eye(l, dtype=jnp.float32)[None])

    Y = jax.random.normal(ky, (b, l, c, h, w), jnp.float32)

    Z = jax.jit(functools.partial(gplayer_forward))(params, D, Y)
    Z = jax.block_until_ready(Z)

    # Pure-JAX reference check of the full forward pass.
    s3 = math.sqrt(3.0)
    K = jnp.exp(params["gamma2"]) * (1.0 + s3 * D / jnp.exp(params["ell"])) \
        * jnp.exp(-s3 * D / jnp.exp(params["ell"]))
    A = K + jnp.exp(params["sigma2"]) * jnp.eye(l, dtype=jnp.float32)[None]
    X = jnp.linalg.solve(A, Y.reshape(b, l, -1).astype(jnp.float32))
    Z_ref = jnp.maximum(jnp.einsum("bij,bjn->bin", K, X), 0.0)

    assert Z.shape == (b, l, c * h * w)
    assert Z.dtype == jnp.float32
    assert jnp.allclose(Z, Z_ref, atol=1e-4, rtol=1e-4), float(jnp.max(jnp.abs(Z - Z_ref)))

    print("KERNEL_OK")
</pallas_src>

<mosaic_0001>
module attributes {stable_mosaic.version = 11 : i64} {
  func.func @_gp_apply_kernel(%arg0: i32, %arg1: i32, %arg2: memref<1x8x8xf32, #tpu.memory_space<vmem>>, %arg3: memref<1x8x1024xf32, #tpu.memory_space<vmem>>, %arg4: memref<1x8x1024xf32, #tpu.memory_space<vmem>>) attributes {dimension_semantics = [#tpu.dimension_semantics<parallel>, #tpu.dimension_semantics<parallel>], iteration_bounds = array<i64: 2, 1>, scalar_prefetch = 0 : i64, scratch_operands = 0 : i64, tpu.core_type = #tpu.core_type<tc>, window_params = [{transform_indices = @transform_0, window_bounds = array<i64: 1, 8, 8>}, {transform_indices = @transform_1, window_bounds = array<i64: 1, 8, 1024>}, {transform_indices = @transform_2, window_bounds = array<i64: 1, 8, 1024>}]} {
    %c0 = arith.constant 0 : index
    %c0_0 = arith.constant 0 : index
    %c0_1 = arith.constant 0 : index
    %0 = vector.load %arg2[%c0, %c0_0, %c0_1] : memref<1x8x8xf32, #tpu.memory_space<vmem>>, vector<1x8x8xf32>
    %1 = vector.shape_cast %0 : vector<1x8x8xf32> to vector<8x8xf32>
    %c0_2 = arith.constant 0 : index
    %c0_3 = arith.constant 0 : index
    %c0_4 = arith.constant 0 : index
    %2 = vector.load %arg3[%c0_2, %c0_3, %c0_4] : memref<1x8x1024xf32, #tpu.memory_space<vmem>>, vector<1x8x1024xf32>
    %3 = vector.shape_cast %2 : vector<1x8x1024xf32> to vector<8x1024xf32>
    %cst = arith.constant dense<0.000000e+00> : vector<8x1024xf32>
    %4 = tpu.matmul %1, %3, %cst {dimension_numbers = #tpu.dot_dimension_numbers<[1], [0], [0], [1], [0, 0, 1, 1], [], []>} : vector<8x8xf32>, vector<8x1024xf32>, vector<8x1024xf32> -> vector<8x1024xf32>
    %cst_5 = arith.constant 0.000000e+00 : f32
    %5 = vector.broadcast %cst_5 : f32 to vector<8x1024xf32>
    %6 = arith.maximumf %4, %5 : vector<8x1024xf32>
    %c0_6 = arith.constant 0 : index
    %c0_7 = arith.constant 0 : index
    %c0_8 = arith.constant 0 : index
    %7 = vector.load %arg4[%c0_6, %c0_7, %c0_8] : memref<1x8x1024xf32, #tpu.memory_space<vmem>>, vector<1x8x1024xf32>
    %8 = vector.shape_cast %7 : vector<1x8x1024xf32> to vector<8x1024xf32>
    %9 = vector.shape_cast %6 : vector<8x1024xf32> to vector<1x8x1024xf32>
    tpu.vector_store %arg4[%c0_6, %c0_7, %c0_8], %9 {strides = array<i32>} : memref<1x8x1024xf32, #tpu.memory_space<vmem>>, vector<1x8x1024xf32>,
    return
  }
  func.func @transform_0(%arg0: i32, %arg1: i32) -> (i32, i32, i32) {
    %c0_i32 = arith.constant 0 : i32
    %c0_i32_0 = arith.constant 0 : i32
    %c0_i32_1 = arith.constant 0 : i32
    return %arg0, %c0_i32, %c0_i32_0 : i32, i32, i32
  }
  func.func @transform_1(%arg0: i32, %arg1: i32) -> (i32, i32, i32) {
    %c0_i32 = arith.constant 0 : i32
    %c0_i32_0 = arith.constant 0 : i32
    return %arg0, %c0_i32, %arg1 : i32, i32, i32
  }
  func.func @transform_2(%arg0: i32, %arg1: i32) -> (i32, i32, i32) {
    %c0_i32 = arith.constant 0 : i32
    %c0_i32_0 = arith.constant 0 : i32
    return %arg0, %c0_i32, %arg1 : i32, i32, i32
  }
}

</mosaic_0001>

<llo_original>
// kernel: custom-call.8
$region0: #{custom-call.8}
  %s0 = inlined_call_operand.vmem [shape: f32[2,8,8], index: 0, kind: input, shape index: {}]
  %s1 = inlined_call_operand.vmem [shape: f32[2,8,8], index: 1, kind: output, shape index: {0}]
  %s2 = inlined_call_operand.hbm [shape: s32[2,8], index: 2, kind: output, shape index: {1}]
  %s3 = inlined_call_operand.vmem [shape: s32[2,8], index: 3, kind: output, shape index: {2}]
  %4 = xla_tuple %s1, %s2, %s3
  $region1: #{custom-call.8} parent=0
    #allocation0 [shape = 'u8[8192]{0}', space=vmem, size = 0x2000, scoped, tag = 'operand span for operand 0']
    #allocation1 [shape = 'u8[8192]{0}', space=vmem, size = 0x2000, scoped, tag = 'operand span for operand 1']
    #allocation2 [shape = 'u8[4096]{0}', space=vmem, size = 0x1000, scoped, tag = 'operand span for operand 2']
    #allocation3 [shape = 'u8[2048]{0}', space=vmem, size = 0x800, scoped, tag = 'packed  for operand 2']
    #allocation4 [shape = 's32[2]{0}', space=sflag, size = 0x8, scoped, tag = 'scoped memory for custom-call.8']
    #allocation5 [shape = 'u8[4096]{0}', space=vmem, size = 0x1000, scoped, tag = 'operand span for operand 3']
    #allocation6 [shape = 'u8[2048]{0}', space=vmem, size = 0x800, scoped, tag = 'packed  for operand 3']
    %5 = vsyncpa [#allocation4], 0
    %s6 = scalar_lea.sflag [#allocation4], 1
    %7 = vsyncpa %s6, 0
    loop: start=0, step=1, limit=4
    $region2: #{custom-call.8} parent=1 // loop_pre_header
      _
    $region3: #{custom-call.8} parent=1 // loop_header
      %s9 = sphi 0, %s13
      %p10 = scmp.ge.s32.totalorder %s9, 4
      %s21 = sphi 0, %s23
      %s24 = sphi 0, %s21
      %s25 = sphi 0, %s24
      %s41 = sphi 0, %s25
      %s49 = sphi 0, %s51
      %s52 = sphi 0, %s49
      %s53 = sphi 0, %s52
      %s69 = sphi 0, %s53
    $region4: #{custom-call.8} parent=1 // loop_header_branch
      %12 = sbr.rel (%p10) target = $region8
    $region5: #{custom-call.8} parent=1 // loop_body
      %s14 = ssub.s32 %s9, 1
      %s15 = ssub.s32 %s9, 2
      %s16 = sadd.s32 %s9, 1
      %s17 = sshrl.u32 %s9, 3
      %s18 = sshrl.u32 %s16, 3
      %s19 = ssub.s32 %s17, %s18
      %p20 = scmp.eq.s32.totalorder %s19, 0
      %s22 = sadd.s32 %s21, 1
      %s23 = scalar_select %p20, %s21, %s22
      %p26 = pneg %p20
      %p27 = scmp.eq.s32.totalorder %s9, 1
      %p28 = por %p26, %p27
      %p29 = scmp.ne.s32.totalorder %s21, %s24
      %p30 = scmp.eq.s32.totalorder %s9, 0
      %p31 = por %p29, %p30
      %p32 = scmp.ne.s32.totalorder %s21, %s24
      %p33 = scmp.eq.s32.totalorder %s14, 1
      %p34 = por %p32, %p33
      %p35 = scmp.ne.s32.totalorder %s24, %s25
      %p36 = scmp.eq.s32.totalorder %s14, 0
      %p37 = por %p35, %p36
      %p38 = scmp.ne.s32.totalorder %s24, %s25
      %p39 = scmp.eq.s32.totalorder %s15, 1
      %p40 = por %p38, %p39
      %p42 = scmp.ne.s32.totalorder %s25, %s41
      %p43 = scmp.eq.s32.totalorder %s15, 0
      %p44 = por %p42, %p43
      %s45 = sshrl.u32 %s9, 3
      %s46 = sshrl.u32 %s16, 3
      %s47 = ssub.s32 %s45, %s46
      %p48 = scmp.eq.s32.totalorder %s47, 0
      %s50 = sadd.s32 %s49, 1
      %s51 = scalar_select %p48, %s49, %s50
      %p54 = pneg %p48
      %p55 = scmp.eq.s32.totalorder %s9, 1
      %p56 = por %p54, %p55
      %p57 = scmp.ne.s32.totalorder %s49, %s52
      %p58 = scmp.eq.s32.totalorder %s9, 0
      %p59 = por %p57, %p58
      %p60 = scmp.ne.s32.totalorder %s49, %s52
      %p61 = scmp.eq.s32.totalorder %s14, 1
      %p62 = por %p60, %p61
      %p63 = scmp.ne.s32.totalorder %s52, %s53
      %p64 = scmp.eq.s32.totalorder %s14, 0
      %p65 = por %p63, %p64
      %p66 = scmp.ne.s32.totalorder %s52, %s53
      %p67 = scmp.eq.s32.totalorder %s15, 1
      %p68 = por %p66, %p67
      %p70 = scmp.ne.s32.totalorder %s53, %s69
      %p71 = scmp.eq.s32.totalorder %s15, 0
      %p72 = por %p70, %p71
      %p73 = scmp.le.s32.totalorder 1, %s9
      %p74 = scmp.lt.s32.totalorder %s9, 3
      %p75 = pnand %p73, %p74
      %p76 = pneg %p75
      // Predicated region
      $region9: #{custom-call.8} parent=5 // pred_check
        _
      $region10: #{custom-call.8} parent=5 // pred_check_branch
        %78 = sbr.rel (%p75) target = $region12
      $region11: #{custom-call.8} parent=5 // pred_region
        %s79 = ssub.s32 %s9, 1
      $region12: #{custom-call.8} parent=5 // pred_fallthru
        _
      %p80 = scmp.lt.s32.totalorder %s9, 2
      // Predicated region
      $region13: #{custom-call.8} parent=5 // pred_check
        %p81 = pneg %p80
      $region14: #{custom-call.8} parent=5 // pred_check_branch
        %83 = sbr.rel (%p81) target = $region16
      $region15: #{custom-call.8} parent=5 // pred_region
        %s84 = sand.u32 %s9, 1
        %s85 = sand.u32 %s9, 1
        %s86 = smul.addr %s85, 8
        %s87 = scalar_lea.vmem [#allocation0], %s86
        %s88 = smul.addr %s9, 8
        %s89 = scalar_lea.vmem %s0, %s88
        // Predicated region
        $region17: #{custom-call.8} parent=15 // pred_check
          _
        $region18: #{custom-call.8} parent=15 // pred_check_branch
          %91 = sbr.rel (0) target = $region20
        $region19: #{custom-call.8} parent=15 // pred_region
          // Predicated region
          $region21: #{custom-call.8} parent=19 // pred_check
            _
          $region22: #{custom-call.8} parent=19 // pred_check_branch
            %93 = sbr.rel (0) target = $region24
          $region23: #{custom-call.8} parent=19 // pred_region
            // Predicated region
            $region36: #{custom-call.8} parent=23 // pred_check
              _
            $region37: #{custom-call.8} parent=23 // pred_check_branch
              %109 = sbr.rel (0) target = $region39
            $region38: #{custom-call.8} parent=23 // pred_region
              loop: start=0, step=1, limit=1
              $region40: #{custom-call.8} parent=38 // loop_pre_header
                _
              $region41: #{custom-call.8} parent=38 // loop_header
                %s111 = sphi 0, %s115
                %p112 = scmp.ge.s32.totalorder %s111, 1
                %s116 = sphi %s89, %s89
                %s117 = sphi %s87, %s87
              $region42: #{custom-call.8} parent=38 // loop_header_branch
                %114 = sbr.rel (%p112) target = $region46
              $region43: #{custom-call.8} parent=38 // loop_body
                %v118 = vld [vmem:[%s116] sm:$0xff]
                %119 = vst [vmem:[%s117] sm:$0xff] %v118
              $region44: #{custom-call.8} parent=38 // loop_footer
                %s115 = sadd.s32 1, %s111
              $region45: #{custom-call.8} parent=38 // loop_footer_branch
                %110 = sbr.rel target = $region41
              $region46: #{custom-call.8} parent=38 // loop_exit
                _
            $region39: #{custom-call.8} parent=23 // pred_fallthru
              _
            // Predicated region
            $region47: #{custom-call.8} parent=23 // pred_check
              _
            $region48: #{custom-call.8} parent=23 // pred_check_branch
              %121 = sbr.rel target = $region50
            $region49: #{custom-call.8} parent=23 // pred_region
              _
            $region50: #{custom-call.8} parent=23 // pred_fallthru
              _
          $region24: #{custom-call.8} parent=19 // pred_fallthru
            _
          // Predicated region
          $region25: #{custom-call.8} parent=19 // pred_check
            _
          $region26: #{custom-call.8} parent=19 // pred_check_branch
            %95 = sbr.rel target = $region28
          $region27: #{custom-call.8} parent=19 // pred_region
            %s97 = ssub.s32 256, 1
            loop: start=0, step=1, limit=1
            $region29: #{custom-call.8} parent=27 // loop_pre_header
              _
            $region30: #{custom-call.8} parent=27 // loop_header
              %s99 = sphi 0, %s103
              %p100 = scmp.ge.s32.totalorder %s99, 1
              %s104 = sphi %s89, %s89
              %s105 = sphi %s87, %s87
            $region31: #{custom-call.8} parent=27 // loop_header_branch
              %102 = sbr.rel (%p100) target = $region35
            $region32: #{custom-call.8} parent=27 // loop_body
              %v106 = vld [vmem:[%s104] sm:%s97]
              %107 = vst [vmem:[%s105] sm:%s97] %v106
            $region33: #{custom-call.8} parent=27 // loop_footer
              %s103 = sadd.s32 1, %s99
            $region34: #{custom-call.8} parent=27 // loop_footer_branch
              %98 = sbr.rel target = $region30
            $region35: #{custom-call.8} parent=27 // loop_exit
              _
          $region28: #{custom-call.8} parent=19 // pred_fallthru
            _
        $region20: #{custom-call.8} parent=15 // pred_fallthru
          _
        %122 = vnop
      $region16: #{custom-call.8} parent=5 // pred_fallthru
        _
      %p123 = scmp.le.s32.totalorder 1, %s9
      %p124 = scmp.lt.s32.totalorder %s9, 3
      %p125 = pnand %p123, %p124
      %p126 = pneg %p125
      // Predicated region
      $region51: #{custom-call.8} parent=5 // pred_check
        _
      $region52: #{custom-call.8} parent=5 // pred_check_branch
        %128 = sbr.rel (%p125) target = $region54
      $region53: #{custom-call.8} parent=5 // pred_region
        #allocation7 [shape = 's32[8,128]{1,0}', space=vmem, size = 0x1000, scoped, tag = 'scratch for permutations']
        %s129 = ssub.s32 %s9, 1
        %s130 = sand.u32 %s14, 1
        %s131 = sand.u32 %s14, 1
        %s132 = smul.addr %s131, 8
        %s133 = scalar_lea.vmem [#allocation0], %s132
        %s134 = sand.u32 %s14, 1
        %s135 = sand.u32 %s14, 1
        %s136 = smul.addr %s135, 8
        %s137 = scalar_lea.vmem [#allocation0], %s136
        %s138 = sand.u32 %s14, 1
        %s139 = sand.u32 %s14, 1
        %s140 = smul.addr %s139, 8
        %s141 = scalar_lea.vmem [#allocation1], %s140
        %p142 = pneg %p37
        %p143 = pneg %p34
        %s144 = sand.u32 %s24, 1
        %s145 = scalar_lea.sflag [#allocation4], %s144
        %s146 = sand.u32 %s24, 1
        %s147 = smul.addr %s146, 2
        %s148 = scalar_lea.vmem [#allocation3], %s147
        %p149 = pneg %p65
        %p150 = pneg %p62
        %s151 = sand.u32 %s52, 1
        %s152 = sand.u32 %s52, 1
        %s153 = smul.addr %s152, 2
        %s154 = scalar_lea.vmem [#allocation6], %s153
        %s155 = sshrl.u32 %s14, 3
        %s156 = sshrl.u32 %s14, 3
        %v157 = vld [vmem:[%s133] sm:$0xff]
        %158 = vst [vmem:[%s141] sm:$0xff] %v157
        %s159 = sand.u32 %s14, 7
        %s160 = scalar_lea.vmem [#allocation2], %s159
        %s161 = sand.u32 %s14, 7
        %s162 = scalar_lea.vmem [#allocation5], %s161
        %163 = vst [vmem:[%s160] sm:$0x1] 0
        %v164 = vlaneseq
        %v165 = vshrl.u32 %v164, 7
        %v166 = vmov %v165
        %168 = vst [vmem:[#allocation7] sm:$0xff] %v166
        loop: start=0, step=1, limit=8
        $region56: #{custom-call.8} parent=53 // loop_pre_header
          _
        $region57: #{custom-call.8} parent=53 // loop_header
          %s170 = sphi 0, %s174
          %p171 = scmp.ge.s32.totalorder %s170, 8
        $region58: #{custom-call.8} parent=53 // loop_header_branch
          %173 = sbr.rel (%p171) target = $region62
        $region59: #{custom-call.8} parent=53 // loop_body
          %v175 = vstv %s170
          %v176 = vlaneseq
          %v177 = vshrl.u32 %v176, 7
          %v178 = vmov %v177
          %v179 = vld [vmem:[%s141] sm:$0xff]
          %v180 = vand.u32 2147483647, %v179
          %v182 = vstv %s170
          %vm183 = vcmp.ge.s32.totalorder %v178, %v182
          %vm184 = vcmp.lt.s32.totalorder %v178, 8
          %vm185 = vmand %vm183, %vm184
          %vm186 = vcmp.lt.f32.partialorder -inf, %v180
          %vm187 = vmand %vm185, %vm186
          %v188 = vsel %vm187, %v178, %v175
          %v189 = vsel %vm187, %v180, -inf
          %v190 = vrot.slane %v189, 1
          %v191 = vrot.slane %v188, 1
          %vm192 = vcmp.ge.f32.partialorder %v190, %v189
          %v193 = vsel %vm192, %v190, %v189
          %v194 = vsel %vm192, %v191, %v188
          %v195 = vrot.slane %v190, 1
          %v196 = vrot.slane %v191, 1
          %vm197 = vcmp.ge.f32.partialorder %v195, %v193
          %v198 = vsel %vm197, %v195, %v193
          %v199 = vsel %vm197, %v196, %v194
          %v200 = vrot.slane %v195, 1
          %v201 = vrot.slane %v196, 1
          %vm202 = vcmp.ge.f32.partialorder %v200, %v198
          %v203 = vsel %vm202, %v200, %v198
          %v204 = vsel %vm202, %v201, %v199
          %v205 = vrot.slane %v200, 1
          %v206 = vrot.slane %v201, 1
          %vm207 = vcmp.ge.f32.partialorder %v205, %v203
          %v208 = vsel %vm207, %v205, %v203
          %v209 = vsel %vm207, %v206, %v204
          %v210 = vrot.slane %v205, 1
          %v211 = vrot.slane %v206, 1
          %vm212 = vcmp.ge.f32.partialorder %v210, %v208
          %v213 = vsel %vm212, %v210, %v208
          %v214 = vsel %vm212, %v211, %v209
          %v215 = vrot.slane %v210, 1
          %v216 = vrot.slane %v211, 1
          %vm217 = vcmp.ge.f32.partialorder %v215, %v213
          %v218 = vsel %vm217, %v215, %v213
          %v219 = vsel %vm217, %v216, %v214
          %v220 = vrot.slane %v215, 1
          %v221 = vrot.slane %v216, 1
          %vm222 = vcmp.ge.f32.partialorder %v220, %v218
          %v223 = vsel %vm222, %v220, %v218
          %v224 = vsel %vm222, %v221, %v219
          %s225 = ssub.s32 128, %s170
          %226 = vrot.lane.b32.xlu0 %v224, %s225
          %v227 = vpop.permute.xlu0 %226
          %s228 = vtos %v227
          %v229 = vstv %s170
          %v230 = vlaneseq
          %v231 = vand.u32 %v230, 127
          %vm232 = vcmp.eq.s32.totalorder %v231, %v229
          %v233 = vstv %s228
          %v234 = vld [vmem:[%s160] ss:$0 sm:$0xff]
          %v235 = vsel %vm232, %v233, %v234
          %236 = vst [vmem:[%s160] sm:$0x1] %v235
          %s237 = scalar_lea.vmem %s141, %s170 [#allocation1]
          %s238 = scalar_lea.vmem %s141, %s228 [#allocation1]
          %v239 = vld [vmem:[%s237] ss:$0 sm:$0xff]
          %v240 = vld [vmem:[%s238] ss:$0 sm:$0xff]
          %241 = vst [vmem:[%s238] sm:$0x1] %v239
          %242 = vst [vmem:[%s237] sm:$0x1] %v240
          %s243 = scalar_lea.vmem [#allocation7], %s170
          %s244 = scalar_lea.vmem [#allocation7], %s228
          %v245 = vld [vmem:[%s243] ss:$0 sm:$0xff]
          %v246 = vld [vmem:[%s244] ss:$0 sm:$0xff]
          %247 = vst [vmem:[%s244] sm:$0x1] %v245
          %248 = vst [vmem:[%s243] sm:$0x1] %v246
          %vm249 = vcmp.ne.f32.partialorder %v240, 0.0
          %vm250 = vmand %vm232, %vm249
          %v251 = vsel %vm250, %v240, 1.0
          %v252 = vlaneseq
          %v253 = vand.u32 %v252, 127
          %v254 = vstv %s170
          %vm255 = vcmp.gt.s32.totalorder %v253, %v254
          %v256 = vsel %vm255, %v240, 0.0
          %v257 = vlaneseq
          %v258 = vshrl.u32 %v257, 7
          %v259 = vmov %v258
          %v260 = vld [vmem:[%s141] sm:$0xff]
          %v262 = vstv %s170
          %vm263 = vcmp.gt.s32.totalorder %v259, %v262
          %v264 = vsel %vm263, %v251, 1.0
          %v265 = vrcp.pop %v264
          %v266 = vmul.f32 %v264, %v265
          %v267 = vsub.f32 1.0, %v266
          %v268 = vmul.f32 %v265, %v267
          %v269 = vadd.f32 %v265, %v268
          %vm270 = vweird.f32 %v264
          %vm271 = vweird.f32 %v265
          %vm272 = vmor %vm270, %vm271
          %v273 = vsel %vm272, %v265, %v269
          %v274 = vand.u32 2147483647, %v264
          %vm275 = vcmp.eq.f32.partialorder %v274, 8.507059e+37
          %v276 = vand.u32 %v264, 2147483648
          %v277 = vor.u32 1.1754944e-38, %v276
          %v278 = vsel %vm275, %v277, %v273
          %v279 = vmul.f32 %v260, %v278
          %vm280 = vmand %vm263, %vm232
          %v281 = vsel %vm280, %v279, 0.0
          %282 = vadd.xlane.f32.xlu0 %v281
          %v283 = vpop.xlane.xlu0 %282
          %v284 = vmul.f32 %v283, %v256
          %v285 = vsub.f32 %v279, %v284
          %286 = vst [vmem:[%s141] sm:$0xff] %v285
        $region60: #{custom-call.8} parent=53 // loop_footer
          %s174 = sadd.s32 1, %s170
        $region61: #{custom-call.8} parent=53 // loop_footer_branch
          %169 = sbr.rel target = $region57
        $region62: #{custom-call.8} parent=53 // loop_exit
          _
        %v287 = vld [vmem:[#allocation7] sm:$0xff]
        %s288 = scalar_lea.vmem [#allocation7], 8
        %s289 = scalar_lea.vmem [#allocation7], 16
        %s290 = scalar_lea.vmem [#allocation7], 24
        %s291 = scalar_lea.vmem [#allocation7], 32
        %s292 = scalar_lea.vmem [#allocation7], 40
        %s293 = scalar_lea.vmem [#allocation7], 48
        %s294 = scalar_lea.vmem [#allocation7], 56
        %s295 = scalar_lea.vmem [#allocation7], 64
        %s296 = scalar_lea.vmem [#allocation7], 72
        %s297 = scalar_lea.vmem [#allocation7], 80
        %s298 = scalar_lea.vmem [#allocation7], 88
        %s299 = scalar_lea.vmem [#allocation7], 96
        %s300 = scalar_lea.vmem [#allocation7], 104
        %s301 = scalar_lea.vmem [#allocation7], 112
        %s302 = scalar_lea.vmem [#allocation7], 120
        %303 = vxpose.xlu0.b32.start [1/16] %v287, 128
        %304 = vxpose.xlu0.b32.cont [2/16] 0, 128
        %305 = vxpose.xlu0.b32.cont [3/16] 0, 128
        %306 = vxpose.xlu0.b32.cont [4/16] 0, 128
        %307 = vxpose.xlu0.b32.cont [5/16] 0, 128
        %308 = vxpose.xlu0.b32.cont [6/16] 0, 128
        %309 = vxpose.xlu0.b32.cont [7/16] 0, 128
        %310 = vxpose.xlu0.b32.cont [8/16] 0, 128
        %311 = vxpose.xlu0.b32.cont [9/16] 0, 128
        %312 = vxpose.xlu0.b32.cont [10/16] 0, 128
        %313 = vxpose.xlu0.b32.cont [11/16] 0, 128
        %314 = vxpose.xlu0.b32.cont [12/16] 0, 128
        %315 = vxpose.xlu0.b32.cont [13/16] 0, 128
        %316 = vxpose.xlu0.b32.cont [14/16] 0, 128
        %317 = vxpose.xlu0.b32.cont [15/16] 0, 128
        %318 = vxpose.xlu0.b32.end [16/16] 0, 128
        %v319 = vpop.trf.xlu0
        %v320 = vpop.trf.xlu0
        %v321 = vpop.trf.xlu0
        %v322 = vpop.trf.xlu0
        %v323 = vpop.trf.xlu0
        %v324 = vpop.trf.xlu0
        %v325 = vpop.trf.xlu0
        %v326 = vpop.trf.xlu0
        %v327 = vpop.trf.xlu0
        %v328 = vpop.trf.xlu0
        %v329 = vpop.trf.xlu0
        %v330 = vpop.trf.xlu0
        %v331 = vpop.trf.xlu0
        %v332 = vpop.trf.xlu0
        %v333 = vpop.trf.xlu0
        %v334 = vpop.trf.xlu0
        %335 = vst [vmem:[%s162] sm:$0x1] %v319
        %s337 = ssub.s32 4, 1
        %v338 = vld [vmem:[#allocation2] sm:%s337]
        %s340 = ssub.s32 4, 1
        %341 = vst [vmem:[%s148] sm:%s340] %v338
        %s343 = ssub.s32 4, 1
        %v344 = vld [vmem:[#allocation5] sm:%s343]
        %s346 = ssub.s32 4, 1
        %347 = vst [vmem:[%s154] sm:%s346] %v344
        %s348 = sand.u32 %s14, 1
        %s349 = sand.u32 %s14, 1
        %s350 = smul.addr %s349, 8
        %s351 = scalar_lea.vmem [#allocation1], %s350
        %s352 = sand.u32 %s24, 1
        %s353 = scalar_lea.sflag [#allocation4], %s352
        %s354 = sand.u32 %s24, 1
        %s355 = smul.addr %s354, 2
        %s356 = scalar_lea.vmem [#allocation3], %s355
        %s357 = sand.u32 %s52, 1
        %s358 = sand.u32 %s52, 1
        %s359 = smul.addr %s358, 2
        %s360 = scalar_lea.vmem [#allocation6], %s359
        %s361 = smul.addr %s14, 8
        %s362 = scalar_lea.vmem %s1, %s361
        // Predicated region
        $region63: #{custom-call.8} parent=53 // pred_check
          _
        $region64: #{custom-call.8} parent=53 // pred_check_branch
          %364 = sbr.rel (0) target = $region66
        $region65: #{custom-call.8} parent=53 // pred_region
          // Predicated region
          $region67: #{custom-call.8} parent=65 // pred_check
            _
          $region68: #{custom-call.8} parent=65 // pred_check_branch
            %366 = sbr.rel (0) target = $region70
          $region69: #{custom-call.8} parent=65 // pred_region
            // Predicated region
            $region82: #{custom-call.8} parent=69 // pred_check
              _
            $region83: #{custom-call.8} parent=69 // pred_check_branch
              %382 = sbr.rel (0) target = $region85
            $region84: #{custom-call.8} parent=69 // pred_region
              loop: start=0, step=1, limit=1
              $region86: #{custom-call.8} parent=84 // loop_pre_header
                _
              $region87: #{custom-call.8} parent=84 // loop_header
                %s384 = sphi 0, %s388
                %p385 = scmp.ge.s32.totalorder %s384, 1
                %s389 = sphi %s351, %s351
                %s390 = sphi %s362, %s362
              $region88: #{custom-call.8} parent=84 // loop_header_branch
                %387 = sbr.rel (%p385) target = $region92
              $region89: #{custom-call.8} parent=84 // loop_body
                %v391 = vld [vmem:[%s389] sm:$0xff]
                %392 = vst [vmem:[%s390] sm:$0xff] %v391
              $region90: #{custom-call.8} parent=84 // loop_footer
                %s388 = sadd.s32 1, %s384
              $region91: #{custom-call.8} parent=84 // loop_footer_branch
                %383 = sbr.rel target = $region87
              $region92: #{custom-call.8} parent=84 // loop_exit
                _
            $region85: #{custom-call.8} parent=69 // pred_fallthru
              _
            // Predicated region
            $region93: #{custom-call.8} parent=69 // pred_check
              _
            $region94: #{custom-call.8} parent=69 // pred_check_branch
              %394 = sbr.rel target = $region96
            $region95: #{custom-call.8} parent=69 // pred_region
              _
            $region96: #{custom-call.8} parent=69 // pred_fallthru
              _
          $region70: #{custom-call.8} parent=65 // pred_fallthru
            _
          // Predicated region
          $region71: #{custom-call.8} parent=65 // pred_check
            _
          $region72: #{custom-call.8} parent=65 // pred_check_branch
            %368 = sbr.rel target = $region74
          $region73: #{custom-call.8} parent=65 // pred_region
            %s370 = ssub.s32 256, 1
            loop: start=0, step=1, limit=1
            $region75: #{custom-call.8} parent=73 // loop_pre_header
              _
            $region76: #{custom-call.8} parent=73 // loop_header
              %s372 = sphi 0, %s376
              %p373 = scmp.ge.s32.totalorder %s372, 1
              %s377 = sphi %s351, %s351
              %s378 = sphi %s362, %s362
            $region77: #{custom-call.8} parent=73 // loop_header_branch
              %375 = sbr.rel (%p373) target = $region81
            $region78: #{custom-call.8} parent=73 // loop_body
              %v379 = vld [vmem:[%s377] sm:%s370]
              %380 = vst [vmem:[%s378] sm:%s370] %v379
            $region79: #{custom-call.8} parent=73 // loop_footer
              %s376 = sadd.s32 1, %s372
            $region80: #{custom-call.8} parent=73 // loop_footer_branch
              %371 = sbr.rel target = $region76
            $region81: #{custom-call.8} parent=73 // loop_exit
              _
          $region74: #{custom-call.8} parent=65 // pred_fallthru
            _
        $region66: #{custom-call.8} parent=53 // pred_fallthru
          _
        %395 = vnop
        // Predicated region
        $region97: #{custom-call.8} parent=53 // pred_check
          %p396 = pneg %p34
        $region98: #{custom-call.8} parent=53 // pred_check_branch
          %398 = sbr.rel (%p396) target = $region100
        $region99: #{custom-call.8} parent=53 // pred_region
          %s399 = sshrl.u32 %s14, 3
          %401 = vsyncadd %s353, 0
          %s402 = smul.addr %s399, 2
          %s403 = scalar_lea.hbm %s2, %s402
          %s405 = sshll.u32 %s356, 4
          %s406 = int_to_ptr.vmem [resolvable:$true] %s405
          %s407 = sshll.u32 %s403, 4
          %s408 = int_to_ptr.hbm [resolvable:$true] %s407
          %410 = dma.vmem_to_hbm [thread:$0]  %s406, 32, %s408, %s353
        $region100: #{custom-call.8} parent=53 // pred_fallthru
          _
        // Predicated region
        $region101: #{custom-call.8} parent=53 // pred_check
          %p411 = pneg %p62
        $region102: #{custom-call.8} parent=53 // pred_check_branch
          %413 = sbr.rel (%p411) target = $region104
        $region103: #{custom-call.8} parent=53 // pred_region
          %s414 = sshrl.u32 %s14, 3
          %s415 = smul.addr %s414, 2
          %s416 = scalar_lea.vmem %s3, %s415
          // Predicated region
          $region105: #{custom-call.8} parent=103 // pred_check
            _
          $region106: #{custom-call.8} parent=103 // pred_check_branch
            %418 = sbr.rel (0) target = $region108
          $region107: #{custom-call.8} parent=103 // pred_region
            // Predicated region
            $region109: #{custom-call.8} parent=107 // pred_check
              _
            $region110: #{custom-call.8} parent=107 // pred_check_branch
              %420 = sbr.rel target = $region112
            $region111: #{custom-call.8} parent=107 // pred_region
              // Predicated region
              $region124: #{custom-call.8} parent=111 // pred_check
                _
              $region125: #{custom-call.8} parent=111 // pred_check_branch
                %436 = sbr.rel (0) target = $region127
              $region126: #{custom-call.8} parent=111 // pred_region
                %s438 = ssub.s32 4, 1
                loop: start=0, step=1, limit=1
                $region128: #{custom-call.8} parent=126 // loop_pre_header
                  _
                $region129: #{custom-call.8} parent=126 // loop_header
                  %s440 = sphi 0, %s444
                  %p441 = scmp.ge.s32.totalorder %s440, 1
                  %s445 = sphi %s360, %s360
                  %s446 = sphi %s416, %s416
                $region130: #{custom-call.8} parent=126 // loop_header_branch
                  %443 = sbr.rel (%p441) target = $region134
                $region131: #{custom-call.8} parent=126 // loop_body
                  %v447 = vld [vmem:[%s445] sm:%s438]
                  %448 = vst [vmem:[%s446] sm:%s438] %v447
                $region132: #{custom-call.8} parent=126 // loop_footer
                  %s444 = sadd.s32 1, %s440
                $region133: #{custom-call.8} parent=126 // loop_footer_branch
                  %439 = sbr.rel target = $region129
                $region134: #{custom-call.8} parent=126 // loop_exit
                  _
              $region127: #{custom-call.8} parent=111 // pred_fallthru
                _
            $region112: #{custom-call.8} parent=107 // pred_fallthru
              _
            // Predicated region
            $region113: #{custom-call.8} parent=107 // pred_check
              _
            $region114: #{custom-call.8} parent=107 // pred_check_branch
              %422 = sbr.rel (0) target = $region116
            $region115: #{custom-call.8} parent=107 // pred_region
              %s424 = ssub.s32 4, 1
              loop: start=0, step=1, limit=1
              $region117: #{custom-call.8} parent=115 // loop_pre_header
                _
              $region118: #{custom-call.8} parent=115 // loop_header
                %s426 = sphi 0, %s430
                %p427 = scmp.ge.s32.totalorder %s426, 1
                %s431 = sphi %s360, %s360
                %s432 = sphi %s416, %s416
              $region119: #{custom-call.8} parent=115 // loop_header_branch
                %429 = sbr.rel (%p427) target = $region123
              $region120: #{custom-call.8} parent=115 // loop_body
                %v433 = vld [vmem:[%s431] sm:%s424]
                %434 = vst [vmem:[%s432] sm:%s424] %v433
              $region121: #{custom-call.8} parent=115 // loop_footer
                %s430 = sadd.s32 1, %s426
              $region122: #{custom-call.8} parent=115 // loop_footer_branch
                %425 = sbr.rel target = $region118
              $region123: #{custom-call.8} parent=115 // loop_exit
                _
            $region116: #{custom-call.8} parent=107 // pred_fallthru
              _
          $region108: #{custom-call.8} parent=103 // pred_fallthru
            _
          %449 = vnop
        $region104: #{custom-call.8} parent=53 // pred_fallthru
          _
      $region54: #{custom-call.8} parent=5 // pred_fallthru
        _
      %p450 = scmp.le.s32.totalorder 2, %s9
      // Predicated region
      $region135: #{custom-call.8} parent=5 // pred_check
        %p451 = pneg %p450
      $region136: #{custom-call.8} parent=5 // pred_check_branch
        %453 = sbr.rel (%p451) target = $region138
      $region137: #{custom-call.8} parent=5 // pred_region
        %s454 = ssub.s32 %s9, 2
        %s455 = sand.u32 %s15, 1
        %s456 = sand.u32 %s15, 1
        %s457 = smul.addr %s456, 8
        %s458 = scalar_lea.vmem [#allocation1], %s457
        // Predicated region
        $region139: #{custom-call.8} parent=137 // pred_check
          %p459 = pneg %p40
        $region140: #{custom-call.8} parent=137 // pred_check_branch
          %461 = sbr.rel (%p459) target = $region142
        $region141: #{custom-call.8} parent=137 // pred_region
          %s462 = sand.u32 %s25, 1
          %s463 = scalar_lea.sflag [#allocation4], %s462
          %s464 = sand.u32 %s25, 1
          %s465 = smul.addr %s464, 2
          %s466 = scalar_lea.vmem [#allocation3], %s465
          %468 = dma.done %s463, 32
        $region142: #{custom-call.8} parent=137 // pred_fallthru
          _
        // Predicated region
        $region143: #{custom-call.8} parent=137 // pred_check
          %p469 = pneg %p68
        $region144: #{custom-call.8} parent=137 // pred_check_branch
          %471 = sbr.rel (%p469) target = $region146
        $region145: #{custom-call.8} parent=137 // pred_region
          %s472 = sand.u32 %s53, 1
          %s473 = sand.u32 %s53, 1
          %s474 = smul.addr %s473, 2
          %s475 = scalar_lea.vmem [#allocation6], %s474
        $region146: #{custom-call.8} parent=137 // pred_fallthru
          _
      $region138: #{custom-call.8} parent=5 // pred_fallthru
        _
    $region6: #{custom-call.8} parent=1 // loop_footer
      %s13 = sadd.s32 1, %s9
    $region7: #{custom-call.8} parent=1 // loop_footer_branch
      %8 = sbr.rel target = $region3
    $region8: #{custom-call.8} parent=1 // loop_exit
      _
    %476 = vsyncpa [#allocation4], 1
    %s477 = scalar_lea.sflag [#allocation4], 1
    %478 = vsyncpa %s477, 1

// kernel: custom-call.9
$region0: #{custom-call.9}
  %s0 = inlined_call_operand.vmem [shape: f32[2,1,8,8], index: 0, kind: input, shape index: {}]
  %s1 = inlined_call_operand.vmem [shape: f32[2,1,8,8], index: 1, kind: output, shape index: {}]
  $region1: #{custom-call.9} parent=0
    #allocation0 [shape = 'u8[8192]{0}', space=vmem, size = 0x2000, scoped, tag = 'operand span for operand 0']
    #allocation1 [shape = 'u8[8192]{0}', space=vmem, size = 0x2000, scoped, tag = 'operand span for operand 1']
    loop: start=0, step=1, limit=4
    $region2: #{custom-call.9} parent=1 // loop_pre_header
      _
    $region3: #{custom-call.9} parent=1 // loop_header
      %s3 = sphi 0, %s7
      %p4 = scmp.ge.s32.totalorder %s3, 4
      %s10 = sphi 0, %s36
      %s11 = sphi 0, %s32
      %s12 = sphi 0, %s28
      %s13 = sphi 0, %s24
      %s14 = sphi 0, %s10
      %s15 = sphi 0, %s11
      %s16 = sphi 0, %s12
      %s17 = sphi 0, %s13
      %s18 = sphi 0, %s14
      %s19 = sphi 0, %s15
      %s20 = sphi 0, %s16
      %s21 = sphi 0, %s17
    $region4: #{custom-call.9} parent=1 // loop_header_branch
      %6 = sbr.rel (%p4) target = $region8
    $region5: #{custom-call.9} parent=1 // loop_body
      %s8 = ssub.s32 %s3, 1
      %s9 = ssub.s32 %s3, 2
      %s22 = sadd.s32 1, %s13
      %p23 = scmp.ge.s32.totalorder %s22, 1
      %s24 = scalar_select %p23, 0, %s22
      %s25 = sadd.s32 1, %s12
      %s26 = scalar_select %p23, %s25, %s12
      %p27 = scmp.ge.s32.totalorder %s26, 1
      %s28 = scalar_select %p27, 0, %s26
      %s29 = sadd.s32 1, %s11
      %s30 = scalar_select %p27, %s29, %s11
      %p31 = scmp.ge.s32.totalorder %s30, 1
      %s32 = scalar_select %p31, 0, %s30
      %s33 = sadd.s32 1, %s10
      %s34 = scalar_select %p31, %s33, %s10
      %p35 = scmp.ge.s32.totalorder %s34, 2
      %s36 = scalar_select %p35, 0, %s34
      %p37 = scmp.le.s32.totalorder 1, %s3
      %p38 = scmp.lt.s32.totalorder %s3, 3
      %p39 = pnand %p37, %p38
      %p40 = pneg %p39
      // Predicated region
      $region9: #{custom-call.9} parent=5 // pred_check
        _
      $region10: #{custom-call.9} parent=5 // pred_check_branch
        %42 = sbr.rel (%p39) target = $region12
      $region11: #{custom-call.9} parent=5 // pred_region
        %s43 = ssub.s32 %s3, 1
      $region12: #{custom-call.9} parent=5 // pred_fallthru
        _
      %p44 = scmp.lt.s32.totalorder %s3, 2
      // Predicated region
      $region13: #{custom-call.9} parent=5 // pred_check
        %p45 = pneg %p44
      $region14: #{custom-call.9} parent=5 // pred_check_branch
        %47 = sbr.rel (%p45) target = $region16
      $region15: #{custom-call.9} parent=5 // pred_region
        %s48 = sand.u32 %s3, 1
        %s49 = sand.u32 %s3, 1
        %s50 = smul.addr %s49, 8
        %s51 = scalar_lea.vmem [#allocation0], %s50
        %s52 = sadd.s32 %s13, %s12
        %s53 = sadd.s32 %s52, %s11
        %s54 = sadd.s32 %s53, %s10
        %s55 = smul.addr %s54, 8
        %s56 = scalar_lea.vmem %s0, %s55
        // Predicated region
        $region17: #{custom-call.9} parent=15 // pred_check
          _
        $region18: #{custom-call.9} parent=15 // pred_check_branch
          %58 = sbr.rel (0) target = $region20
        $region19: #{custom-call.9} parent=15 // pred_region
          // Predicated region
          $region21: #{custom-call.9} parent=19 // pred_check
            _
          $region22: #{custom-call.9} parent=19 // pred_check_branch
            %60 = sbr.rel (0) target = $region24
          $region23: #{custom-call.9} parent=19 // pred_region
            // Predicated region
            $region36: #{custom-call.9} parent=23 // pred_check
              _
            $region37: #{custom-call.9} parent=23 // pred_check_branch
              %76 = sbr.rel (0) target = $region39
            $region38: #{custom-call.9} parent=23 // pred_region
              loop: start=0, step=1, limit=1
              $region40: #{custom-call.9} parent=38 // loop_pre_header
                _
              $region41: #{custom-call.9} parent=38 // loop_header
                %s78 = sphi 0, %s82
                %p79 = scmp.ge.s32.totalorder %s78, 1
                %s83 = sphi %s56, %s56
                %s84 = sphi %s51, %s51
              $region42: #{custom-call.9} parent=38 // loop_header_branch
                %81 = sbr.rel (%p79) target = $region46
              $region43: #{custom-call.9} parent=38 // loop_body
                %v85 = vld [vmem:[%s83] sm:$0xff]
                %86 = vst [vmem:[%s84] sm:$0xff] %v85
              $region44: #{custom-call.9} parent=38 // loop_footer
                %s82 = sadd.s32 1, %s78
              $region45: #{custom-call.9} parent=38 // loop_footer_branch
                %77 = sbr.rel target = $region41
              $region46: #{custom-call.9} parent=38 // loop_exit
                _
            $region39: #{custom-call.9} parent=23 // pred_fallthru
              _
            // Predicated region
            $region47: #{custom-call.9} parent=23 // pred_check
              _
            $region48: #{custom-call.9} parent=23 // pred_check_branch
              %88 = sbr.rel target = $region50
            $region49: #{custom-call.9} parent=23 // pred_region
              _
            $region50: #{custom-call.9} parent=23 // pred_fallthru
              _
          $region24: #{custom-call.9} parent=19 // pred_fallthru
            _
          // Predicated region
          $region25: #{custom-call.9} parent=19 // pred_check
            _
          $region26: #{custom-call.9} parent=19 // pred_check_branch
            %62 = sbr.rel target = $region28
          $region27: #{custom-call.9} parent=19 // pred_region
            %s64 = ssub.s32 256, 1
            loop: start=0, step=1, limit=1
            $region29: #{custom-call.9} parent=27 // loop_pre_header
              _
            $region30: #{custom-call.9} parent=27 // loop_header
              %s66 = sphi 0, %s70
              %p67 = scmp.ge.s32.totalorder %s66, 1
              %s71 = sphi %s56, %s56
              %s72 = sphi %s51, %s51
            $region31: #{custom-call.9} parent=27 // loop_header_branch
              %69 = sbr.rel (%p67) target = $region35
            $region32: #{custom-call.9} parent=27 // loop_body
              %v73 = vld [vmem:[%s71] sm:%s64]
              %74 = vst [vmem:[%s72] sm:%s64] %v73
            $region33: #{custom-call.9} parent=27 // loop_footer
              %s70 = sadd.s32 1, %s66
            $region34: #{custom-call.9} parent=27 // loop_footer_branch
              %65 = sbr.rel target = $region30
            $region35: #{custom-call.9} parent=27 // loop_exit
              _
          $region28: #{custom-call.9} parent=19 // pred_fallthru
            _
        $region20: #{custom-call.9} parent=15 // pred_fallthru
          _
        %89 = vnop
      $region16: #{custom-call.9} parent=5 // pred_fallthru
        _
      %p90 = scmp.le.s32.totalorder 1, %s3
      %p91 = scmp.lt.s32.totalorder %s3, 3
      %p92 = pnand %p90, %p91
      %p93 = pneg %p92
      // Predicated region
      $region51: #{custom-call.9} parent=5 // pred_check
        _
      $region52: #{custom-call.9} parent=5 // pred_check_branch
        %95 = sbr.rel (%p92) target = $region54
      $region53: #{custom-call.9} parent=5 // pred_region
        #allocation2 [shape = 'f32[8,8]{1,0}', space=vmem, size = 0x1000, scoped, tag = 'rescaled input a']
        %s96 = ssub.s32 %s3, 1
        %s97 = sand.u32 %s8, 1
        %s98 = sand.u32 %s8, 1
        %s99 = smul.addr %s98, 8
        %s100 = scalar_lea.vmem [#allocation0], %s99
        %s101 = sand.u32 %s8, 1
        %s102 = sand.u32 %s8, 1
        %s103 = smul.addr %s102, 8
        %s104 = scalar_lea.vmem [#allocation0], %s103
        %s105 = sand.u32 %s8, 1
        %s106 = sand.u32 %s8, 1
        %s107 = smul.addr %s106, 8
        %s108 = scalar_lea.vmem [#allocation1], %s107
        %v109 = vlaneseq
        %v110 = vand.u32 %v109, 127
        %vm111 = vcmp.lt.s32.totalorder %v110, 8
        %v112 = vlaneseq
        %v113 = vshrl.u32 %v112, 7
        %vm115 = vcmp.eq.s32.totalorder %v113, %v110
        %v116 = vld [vmem:[%s100] sm:$0xff]
        %v117 = vsel %vm115, %v116, 0.0
        %118 = vadd.xlane.f32.xlu0 %v117
        %v119 = vpop.xlane.xlu0 %118
        %vm120 = vcmp.le.s32.totalorder %v113, %v110
        %vm121 = vmand %vm120, %vm111
        %v122 = vsel %vm121, %v116, 0.0
        %v123 = vrcp.pop %v119
        %v124 = vmul.f32 %v119, %v123
        %v125 = vsub.f32 1.0, %v124
        %v126 = vmul.f32 %v123, %v125
        %v127 = vadd.f32 %v123, %v126
        %vm128 = vweird.f32 %v119
        %vm129 = vweird.f32 %v123
        %vm130 = vmor %vm128, %vm129
        %v131 = vsel %vm130, %v123, %v127
        %v132 = vand.u32 2147483647, %v119
        %vm133 = vcmp.eq.f32.partialorder %v132, 8.507059e+37
        %v134 = vand.u32 %v119, 2147483648
        %v135 = vor.u32 1.1754944e-38, %v134
        %v136 = vsel %vm133, %v135, %v131
        %v137 = vmul.f32 %v122, %v136
        %138 = vst [vmem:[#allocation2] sm:$0xff] %v137
        %v139 = vlaneseq
        %v140 = vand.u32 %v139, 127
        %v141 = vlaneseq
        %v142 = vshrl.u32 %v141, 7
        %vm144 = vcmp.eq.s32.totalorder %v140, %v142
        %v145 = vlaneseq
        %v146 = vand.u32 %v145, 127
        %vm147 = vcmp.eq.s32.totalorder %v146, 7
        %v148 = vsel %vm147, 1.0, -1.0
        %v149 = vsel %vm144, %v148, 0.0
        %s150 = scalar_lea.vmem [#allocation2], 6
        %v151 = vld [vmem:[%s150] ss:$0 sm:$0xff]
        %v152 = vxor.u32 %v151, 2147483648
        %v153 = vlaneseq
        %v154 = vand.u32 %v153, 127
        %vm155 = vcmp.eq.s32.totalorder %v154, 6
        %v156 = vmul.f32 %v152, %v149
        %157 = vadd.xlane.f32.xlu0 %v156
        %v158 = vpop.xlane.xlu0 %157
        %v159 = vsel %vm155, %v158, %v149
        %s160 = scalar_lea.vmem [#allocation2], 5
        %v161 = vld [vmem:[%s160] ss:$0 sm:$0xff]
        %v162 = vxor.u32 %v161, 2147483648
        %v163 = vlaneseq
        %v164 = vand.u32 %v163, 127
        %vm165 = vcmp.eq.s32.totalorder %v164, 5
        %v166 = vmul.f32 %v162, %v159
        %167 = vadd.xlane.f32.xlu0 %v166
        %v168 = vpop.xlane.xlu0 %167
        %v169 = vsel %vm165, %v168, %v159
        %s170 = scalar_lea.vmem [#allocation2], 4
        %v171 = vld [vmem:[%s170] ss:$0 sm:$0xff]
        %v172 = vxor.u32 %v171, 2147483648
        %v173 = vlaneseq
        %v174 = vand.u32 %v173, 127
        %vm175 = vcmp.eq.s32.totalorder %v174, 4
        %v176 = vmul.f32 %v172, %v169
        %177 = vadd.xlane.f32.xlu0 %v176
        %v178 = vpop.xlane.xlu0 %177
        %v179 = vsel %vm175, %v178, %v169
        %s180 = scalar_lea.vmem [#allocation2], 3
        %v181 = vld [vmem:[%s180] ss:$0 sm:$0xff]
        %v182 = vxor.u32 %v181, 2147483648
        %v183 = vlaneseq
        %v184 = vand.u32 %v183, 127
        %vm185 = vcmp.eq.s32.totalorder %v184, 3
        %v186 = vmul.f32 %v182, %v179
        %187 = vadd.xlane.f32.xlu0 %v186
        %v188 = vpop.xlane.xlu0 %187
        %v189 = vsel %vm185, %v188, %v179
        %s190 = scalar_lea.vmem [#allocation2], 2
        %v191 = vld [vmem:[%s190] ss:$0 sm:$0xff]
        %v192 = vxor.u32 %v191, 2147483648
        %v193 = vlaneseq
        %v194 = vand.u32 %v193, 127
        %vm195 = vcmp.eq.s32.totalorder %v194, 2
        %v196 = vmul.f32 %v192, %v189
        %197 = vadd.xlane.f32.xlu0 %v196
        %v198 = vpop.xlane.xlu0 %197
        %v199 = vsel %vm195, %v198, %v189
        %s200 = scalar_lea.vmem [#allocation2], 1
        %v201 = vld [vmem:[%s200] ss:$0 sm:$0xff]
        %v202 = vxor.u32 %v201, 2147483648
        %v203 = vlaneseq
        %v204 = vand.u32 %v203, 127
        %vm205 = vcmp.eq.s32.totalorder %v204, 1
        %v206 = vmul.f32 %v202, %v199
        %207 = vadd.xlane.f32.xlu0 %v206
        %v208 = vpop.xlane.xlu0 %207
        %v209 = vsel %vm205, %v208, %v199
        %v210 = vld [vmem:[#allocation2] ss:$0 sm:$0xff]
        %v211 = vxor.u32 %v210, 2147483648
        %v212 = vlaneseq
        %v213 = vand.u32 %v212, 127
        %vm214 = vcmp.eq.s32.totalorder %v213, 0
        %v215 = vmul.f32 %v211, %v209
        %216 = vadd.xlane.f32.xlu0 %v215
        %v217 = vpop.xlane.xlu0 %216
        %v218 = vsel %vm214, %v217, %v209
        %v219 = vrcp.pop %v119
        %v220 = vmul.f32 %v119, %v219
        %v221 = vsub.f32 1.0, %v220
        %v222 = vmul.f32 %v219, %v221
        %v223 = vadd.f32 %v219, %v222
        %vm224 = vweird.f32 %v119
        %vm225 = vweird.f32 %v219
        %vm226 = vmor %vm224, %vm225
        %v227 = vsel %vm226, %v219, %v223
        %v228 = vand.u32 2147483647, %v119
        %vm229 = vcmp.eq.f32.partialorder %v228, 8.507059e+37
        %v230 = vand.u32 %v119, 2147483648
        %v231 = vor.u32 1.1754944e-38, %v230
        %v232 = vsel %vm229, %v231, %v227
        %v233 = vmul.f32 %v218, %v232
        %vm234 = vweird.f32 %v119
        %v235 = vsel %vm234, %v218, %v233
        %236 = vst [vmem:[%s108] sm:$0xff] %v235
        %s237 = sand.u32 %s8, 1
        %s238 = sand.u32 %s8, 1
        %s239 = smul.addr %s238, 8
        %s240 = scalar_lea.vmem [#allocation1], %s239
        %s241 = sadd.s32 %s17, %s16
        %s242 = sadd.s32 %s241, %s15
        %s243 = sadd.s32 %s242, %s14
        %s244 = smul.addr %s243, 8
        %s245 = scalar_lea.vmem %s1, %s244
        // Predicated region
        $region55: #{custom-call.9} parent=53 // pred_check
          _
        $region56: #{custom-call.9} parent=53 // pred_check_branch
          %247 = sbr.rel (0) target = $region58
        $region57: #{custom-call.9} parent=53 // pred_region
          // Predicated region
          $region59: #{custom-call.9} parent=57 // pred_check
            _
          $region60: #{custom-call.9} parent=57 // pred_check_branch
            %249 = sbr.rel (0) target = $region62
          $region61: #{custom-call.9} parent=57 // pred_region
            // Predicated region
            $region74: #{custom-call.9} parent=61 // pred_check
              _
            $region75: #{custom-call.9} parent=61 // pred_check_branch
              %265 = sbr.rel (0) target = $region77
            $region76: #{custom-call.9} parent=61 // pred_region
              loop: start=0, step=1, limit=1
              $region78: #{custom-call.9} parent=76 // loop_pre_header
                _
              $region79: #{custom-call.9} parent=76 // loop_header
                %s267 = sphi 0, %s271
                %p268 = scmp.ge.s32.totalorder %s267, 1
                %s272 = sphi %s240, %s240
                %s273 = sphi %s245, %s245
              $region80: #{custom-call.9} parent=76 // loop_header_branch
                %270 = sbr.rel (%p268) target = $region84
              $region81: #{custom-call.9} parent=76 // loop_body
                %v274 = vld [vmem:[%s272] sm:$0xff]
                %275 = vst [vmem:[%s273] sm:$0xff] %v274
              $region82: #{custom-call.9} parent=76 // loop_footer
                %s271 = sadd.s32 1, %s267
              $region83: #{custom-call.9} parent=76 // loop_footer_branch
                %266 = sbr.rel target = $region79
              $region84: #{custom-call.9} parent=76 // loop_exit
                _
            $region77: #{custom-call.9} parent=61 // pred_fallthru
              _
            // Predicated region
            $region85: #{custom-call.9} parent=61 // pred_check
              _
            $region86: #{custom-call.9} parent=61 // pred_check_branch
              %277 = sbr.rel target = $region88
            $region87: #{custom-call.9} parent=61 // pred_region
              _
            $region88: #{custom-call.9} parent=61 // pred_fallthru
              _
          $region62: #{custom-call.9} parent=57 // pred_fallthru
            _
          // Predicated region
          $region63: #{custom-call.9} parent=57 // pred_check
            _
          $region64: #{custom-call.9} parent=57 // pred_check_branch
            %251 = sbr.rel target = $region66
          $region65: #{custom-call.9} parent=57 // pred_region
            %s253 = ssub.s32 256, 1
            loop: start=0, step=1, limit=1
            $region67: #{custom-call.9} parent=65 // loop_pre_header
              _
            $region68: #{custom-call.9} parent=65 // loop_header
              %s255 = sphi 0, %s259
              %p256 = scmp.ge.s32.totalorder %s255, 1
              %s260 = sphi %s240, %s240
              %s261 = sphi %s245, %s245
            $region69: #{custom-call.9} parent=65 // loop_header_branch
              %258 = sbr.rel (%p256) target = $region73
            $region70: #{custom-call.9} parent=65 // loop_body
              %v262 = vld [vmem:[%s260] sm:%s253]
              %263 = vst [vmem:[%s261] sm:%s253] %v262
            $region71: #{custom-call.9} parent=65 // loop_footer
              %s259 = sadd.s32 1, %s255
            $region72: #{custom-call.9} parent=65 // loop_footer_branch
              %254 = sbr.rel target = $region68
            $region73: #{custom-call.9} parent=65 // loop_exit
              _
          $region66: #{custom-call.9} parent=57 // pred_fallthru
            _
        $region58: #{custom-call.9} parent=53 // pred_fallthru
          _
        %278 = vnop
      $region54: #{custom-call.9} parent=5 // pred_fallthru
        _
      %p279 = scmp.le.s32.totalorder 2, %s3
      // Predicated region
      $region89: #{custom-call.9} parent=5 // pred_check
        %p280 = pneg %p279
      $region90: #{custom-call.9} parent=5 // pred_check_branch
        %282 = sbr.rel (%p280) target = $region92
      $region91: #{custom-call.9} parent=5 // pred_region
        %s283 = ssub.s32 %s3, 2
        %s284 = sand.u32 %s9, 1
        %s285 = sand.u32 %s9, 1
        %s286 = smul.addr %s285, 8
        %s287 = scalar_lea.vmem [#allocation1], %s286
      $region92: #{custom-call.9} parent=5 // pred_fallthru
        _
    $region6: #{custom-call.9} parent=1 // loop_footer
      %s7 = sadd.s32 1, %s3
    $region7: #{custom-call.9} parent=1 // loop_footer_branch
      %2 = sbr.rel target = $region3
    $region8: #{custom-call.9} parent=1 // loop_exit
      _

// kernel: custom-call.10
$region0: #{custom-call.10}
  %s0 = inlined_call_operand.vmem [shape: f32[2,1,8,8], index: 0, kind: input, shape index: {}]
  %s1 = inlined_call_operand.vmem [shape: f32[2,1,8,8], index: 1, kind: output, shape index: {}]
  $region1: #{custom-call.10} parent=0
    #allocation0 [shape = 'u8[8192]{0}', space=vmem, size = 0x2000, scoped, tag = 'operand span for operand 0']
    #allocation1 [shape = 'u8[8192]{0}', space=vmem, size = 0x2000, scoped, tag = 'operand span for operand 1']
    loop: start=0, step=1, limit=4
    $region2: #{custom-call.10} parent=1 // loop_pre_header
      _
    $region3: #{custom-call.10} parent=1 // loop_header
      %s3 = sphi 0, %s7
      %p4 = scmp.ge.s32.totalorder %s3, 4
      %s10 = sphi 0, %s36
      %s11 = sphi 0, %s32
      %s12 = sphi 0, %s28
      %s13 = sphi 0, %s24
      %s14 = sphi 0, %s10
      %s15 = sphi 0, %s11
      %s16 = sphi 0, %s12
      %s17 = sphi 0, %s13
      %s18 = sphi 0, %s14
      %s19 = sphi 0, %s15
      %s20 = sphi 0, %s16
      %s21 = sphi 0, %s17
    $region4: #{custom-call.10} parent=1 // loop_header_branch
      %6 = sbr.rel (%p4) target = $region8
    $region5: #{custom-call.10} parent=1 // loop_body
      %s8 = ssub.s32 %s3, 1
      %s9 = ssub.s32 %s3, 2
      %s22 = sadd.s32 1, %s13
      %p23 = scmp.ge.s32.totalorder %s22, 1
      %s24 = scalar_select %p23, 0, %s22
      %s25 = sadd.s32 1, %s12
      %s26 = scalar_select %p23, %s25, %s12
      %p27 = scmp.ge.s32.totalorder %s26, 1
      %s28 = scalar_select %p27, 0, %s26
      %s29 = sadd.s32 1, %s11
      %s30 = scalar_select %p27, %s29, %s11
      %p31 = scmp.ge.s32.totalorder %s30, 1
      %s32 = scalar_select %p31, 0, %s30
      %s33 = sadd.s32 1, %s10
      %s34 = scalar_select %p31, %s33, %s10
      %p35 = scmp.ge.s32.totalorder %s34, 2
      %s36 = scalar_select %p35, 0, %s34
      %p37 = scmp.le.s32.totalorder 1, %s3
      %p38 = scmp.lt.s32.totalorder %s3, 3
      %p39 = pnand %p37, %p38
      %p40 = pneg %p39
      // Predicated region
      $region9: #{custom-call.10} parent=5 // pred_check
        _
      $region10: #{custom-call.10} parent=5 // pred_check_branch
        %42 = sbr.rel (%p39) target = $region12
      $region11: #{custom-call.10} parent=5 // pred_region
        %s43 = ssub.s32 %s3, 1
      $region12: #{custom-call.10} parent=5 // pred_fallthru
        _
      %p44 = scmp.lt.s32.totalorder %s3, 2
      // Predicated region
      $region13: #{custom-call.10} parent=5 // pred_check
        %p45 = pneg %p44
      $region14: #{custom-call.10} parent=5 // pred_check_branch
        %47 = sbr.rel (%p45) target = $region16
      $region15: #{custom-call.10} parent=5 // pred_region
        %s48 = sand.u32 %s3, 1
        %s49 = sand.u32 %s3, 1
        %s50 = smul.addr %s49, 8
        %s51 = scalar_lea.vmem [#allocation0], %s50
        %s52 = sadd.s32 %s13, %s12
        %s53 = sadd.s32 %s52, %s11
        %s54 = sadd.s32 %s53, %s10
        %s55 = smul.addr %s54, 8
        %s56 = scalar_lea.vmem %s0, %s55
        // Predicated region
        $region17: #{custom-call.10} parent=15 // pred_check
          _
        $region18: #{custom-call.10} parent=15 // pred_check_branch
          %58 = sbr.rel (0) target = $region20
        $region19: #{custom-call.10} parent=15 // pred_region
          // Predicated region
          $region21: #{custom-call.10} parent=19 // pred_check
            _
          $region22: #{custom-call.10} parent=19 // pred_check_branch
            %60 = sbr.rel (0) target = $region24
          $region23: #{custom-call.10} parent=19 // pred_region
            // Predicated region
            $region36: #{custom-call.10} parent=23 // pred_check
              _
            $region37: #{custom-call.10} parent=23 // pred_check_branch
              %76 = sbr.rel (0) target = $region39
            $region38: #{custom-call.10} parent=23 // pred_region
              loop: start=0, step=1, limit=1
              $region40: #{custom-call.10} parent=38 // loop_pre_header
                _
              $region41: #{custom-call.10} parent=38 // loop_header
                %s78 = sphi 0, %s82
                %p79 = scmp.ge.s32.totalorder %s78, 1
                %s83 = sphi %s56, %s56
                %s84 = sphi %s51, %s51
              $region42: #{custom-call.10} parent=38 // loop_header_branch
                %81 = sbr.rel (%p79) target = $region46
              $region43: #{custom-call.10} parent=38 // loop_body
                %v85 = vld [vmem:[%s83] sm:$0xff]
                %86 = vst [vmem:[%s84] sm:$0xff] %v85
              $region44: #{custom-call.10} parent=38 // loop_footer
                %s82 = sadd.s32 1, %s78
              $region45: #{custom-call.10} parent=38 // loop_footer_branch
                %77 = sbr.rel target = $region41
              $region46: #{custom-call.10} parent=38 // loop_exit
                _
            $region39: #{custom-call.10} parent=23 // pred_fallthru
              _
            // Predicated region
            $region47: #{custom-call.10} parent=23 // pred_check
              _
            $region48: #{custom-call.10} parent=23 // pred_check_branch
              %88 = sbr.rel target = $region50
            $region49: #{custom-call.10} parent=23 // pred_region
              _
            $region50: #{custom-call.10} parent=23 // pred_fallthru
              _
          $region24: #{custom-call.10} parent=19 // pred_fallthru
            _
          // Predicated region
          $region25: #{custom-call.10} parent=19 // pred_check
            _
          $region26: #{custom-call.10} parent=19 // pred_check_branch
            %62 = sbr.rel target = $region28
          $region27: #{custom-call.10} parent=19 // pred_region
            %s64 = ssub.s32 256, 1
            loop: start=0, step=1, limit=1
            $region29: #{custom-call.10} parent=27 // loop_pre_header
              _
            $region30: #{custom-call.10} parent=27 // loop_header
              %s66 = sphi 0, %s70
              %p67 = scmp.ge.s32.totalorder %s66, 1
              %s71 = sphi %s56, %s56
              %s72 = sphi %s51, %s51
            $region31: #{custom-call.10} parent=27 // loop_header_branch
              %69 = sbr.rel (%p67) target = $region35
            $region32: #{custom-call.10} parent=27 // loop_body
              %v73 = vld [vmem:[%s71] sm:%s64]
              %74 = vst [vmem:[%s72] sm:%s64] %v73
            $region33: #{custom-call.10} parent=27 // loop_footer
              %s70 = sadd.s32 1, %s66
            $region34: #{custom-call.10} parent=27 // loop_footer_branch
              %65 = sbr.rel target = $region30
            $region35: #{custom-call.10} parent=27 // loop_exit
              _
          $region28: #{custom-call.10} parent=19 // pred_fallthru
            _
        $region20: #{custom-call.10} parent=15 // pred_fallthru
          _
        %89 = vnop
      $region16: #{custom-call.10} parent=5 // pred_fallthru
        _
      %p90 = scmp.le.s32.totalorder 1, %s3
      %p91 = scmp.lt.s32.totalorder %s3, 3
      %p92 = pnand %p90, %p91
      %p93 = pneg %p92
      // Predicated region
      $region51: #{custom-call.10} parent=5 // pred_check
        _
      $region52: #{custom-call.10} parent=5 // pred_check_branch
        %95 = sbr.rel (%p92) target = $region54
      $region53: #{custom-call.10} parent=5 // pred_region
        #allocation2 [shape = 'f32[8,8]{1,0}', space=vmem, size = 0x1000, scoped, tag = 'rescaled input a']
        %s96 = ssub.s32 %s3, 1
        %s97 = sand.u32 %s8, 1
        %s98 = sand.u32 %s8, 1
        %s99 = smul.addr %s98, 8
        %s100 = scalar_lea.vmem [#allocation0], %s99
        %s101 = sand.u32 %s8, 1
        %s102 = sand.u32 %s8, 1
        %s103 = smul.addr %s102, 8
        %s104 = scalar_lea.vmem [#allocation0], %s103
        %s105 = sand.u32 %s8, 1
        %s106 = sand.u32 %s8, 1
        %s107 = smul.addr %s106, 8
        %s108 = scalar_lea.vmem [#allocation1], %s107
        %v109 = vlaneseq
        %v110 = vand.u32 %v109, 127
        %vm111 = vcmp.lt.s32.totalorder %v110, 8
        %v112 = vlaneseq
        %v113 = vshrl.u32 %v112, 7
        %vm115 = vcmp.eq.s32.totalorder %v113, %v110
        %v116 = vld [vmem:[%s100] sm:$0xff]
        %v117 = vsel %vm115, %v116, 0.0
        %118 = vadd.xlane.f32.xlu0 %v117
        %v119 = vpop.xlane.xlu0 %118
        %vm120 = vcmp.ge.s32.totalorder %v113, %v110
        %vm121 = vmand %vm120, %vm111
        %v122 = vsel %vm121, %v116, 0.0
        %v123 = vrcp.pop %v119
        %v124 = vmul.f32 %v119, %v123
        %v125 = vsub.f32 1.0, %v124
        %v126 = vmul.f32 %v123, %v125
        %v127 = vadd.f32 %v123, %v126
        %vm128 = vweird.f32 %v119
        %vm129 = vweird.f32 %v123
        %vm130 = vmor %vm128, %vm129
        %v131 = vsel %vm130, %v123, %v127
        %v132 = vand.u32 2147483647, %v119
        %vm133 = vcmp.eq.f32.partialorder %v132, 8.507059e+37
        %v134 = vand.u32 %v119, 2147483648
        %v135 = vor.u32 1.1754944e-38, %v134
        %v136 = vsel %vm133, %v135, %v131
        %v137 = vmul.f32 %v122, %v136
        %138 = vst [vmem:[#allocation2] sm:$0xff] %v137
        %v139 = vlaneseq
        %v140 = vand.u32 %v139, 127
        %v141 = vlaneseq
        %v142 = vshrl.u32 %v141, 7
        %vm144 = vcmp.eq.s32.totalorder %v140, %v142
        %v145 = vlaneseq
        %v146 = vand.u32 %v145, 127
        %vm147 = vcmp.eq.s32.totalorder %v146, 0
        %v148 = vsel %vm147, 1.0, -1.0
        %v149 = vsel %vm144, %v148, 0.0
        %s150 = scalar_lea.vmem [#allocation2], 1
        %v151 = vld [vmem:[%s150] ss:$0 sm:$0xff]
        %v152 = vxor.u32 %v151, 2147483648
        %v153 = vlaneseq
        %v154 = vand.u32 %v153, 127
        %vm155 = vcmp.eq.s32.totalorder %v154, 1
        %v156 = vmul.f32 %v152, %v149
        %157 = vadd.xlane.f32.xlu0 %v156
        %v158 = vpop.xlane.xlu0 %157
        %v159 = vsel %vm155, %v158, %v149
        %s160 = scalar_lea.vmem [#allocation2], 2
        %v161 = vld [vmem:[%s160] ss:$0 sm:$0xff]
        %v162 = vxor.u32 %v161, 2147483648
        %v163 = vlaneseq
        %v164 = vand.u32 %v163, 127
        %vm165 = vcmp.eq.s32.totalorder %v164, 2
        %v166 = vmul.f32 %v162, %v159
        %167 = vadd.xlane.f32.xlu0 %v166
        %v168 = vpop.xlane.xlu0 %167
        %v169 = vsel %vm165, %v168, %v159
        %s170 = scalar_lea.vmem [#allocation2], 3
        %v171 = vld [vmem:[%s170] ss:$0 sm:$0xff]
        %v172 = vxor.u32 %v171, 2147483648
        %v173 = vlaneseq
        %v174 = vand.u32 %v173, 127
        %vm175 = vcmp.eq.s32.totalorder %v174, 3
        %v176 = vmul.f32 %v172, %v169
        %177 = vadd.xlane.f32.xlu0 %v176
        %v178 = vpop.xlane.xlu0 %177
        %v179 = vsel %vm175, %v178, %v169
        %s180 = scalar_lea.vmem [#allocation2], 4
        %v181 = vld [vmem:[%s180] ss:$0 sm:$0xff]
        %v182 = vxor.u32 %v181, 2147483648
        %v183 = vlaneseq
        %v184 = vand.u32 %v183, 127
        %vm185 = vcmp.eq.s32.totalorder %v184, 4
        %v186 = vmul.f32 %v182, %v179
        %187 = vadd.xlane.f32.xlu0 %v186
        %v188 = vpop.xlane.xlu0 %187
        %v189 = vsel %vm185, %v188, %v179
        %s190 = scalar_lea.vmem [#allocation2], 5
        %v191 = vld [vmem:[%s190] ss:$0 sm:$0xff]
        %v192 = vxor.u32 %v191, 2147483648
        %v193 = vlaneseq
        %v194 = vand.u32 %v193, 127
        %vm195 = vcmp.eq.s32.totalorder %v194, 5
        %v196 = vmul.f32 %v192, %v189
        %197 = vadd.xlane.f32.xlu0 %v196
        %v198 = vpop.xlane.xlu0 %197
        %v199 = vsel %vm195, %v198, %v189
        %s200 = scalar_lea.vmem [#allocation2], 6
        %v201 = vld [vmem:[%s200] ss:$0 sm:$0xff]
        %v202 = vxor.u32 %v201, 2147483648
        %v203 = vlaneseq
        %v204 = vand.u32 %v203, 127
        %vm205 = vcmp.eq.s32.totalorder %v204, 6
        %v206 = vmul.f32 %v202, %v199
        %207 = vadd.xlane.f32.xlu0 %v206
        %v208 = vpop.xlane.xlu0 %207
        %v209 = vsel %vm205, %v208, %v199
        %s210 = scalar_lea.vmem [#allocation2], 7
        %v211 = vld [vmem:[%s210] ss:$0 sm:$0xff]
        %v212 = vxor.u32 %v211, 2147483648
        %v213 = vlaneseq
        %v214 = vand.u32 %v213, 127
        %vm215 = vcmp.eq.s32.totalorder %v214, 7
        %v216 = vmul.f32 %v212, %v209
        %217 = vadd.xlane.f32.xlu0 %v216
        %v218 = vpop.xlane.xlu0 %217
        %v219 = vsel %vm215, %v218, %v209
        %v220 = vrcp.pop %v119
        %v221 = vmul.f32 %v119, %v220
        %v222 = vsub.f32 1.0, %v221
        %v223 = vmul.f32 %v220, %v222
        %v224 = vadd.f32 %v220, %v223
        %vm225 = vweird.f32 %v119
        %vm226 = vweird.f32 %v220
        %vm227 = vmor %vm225, %vm226
        %v228 = vsel %vm227, %v220, %v224
        %v229 = vand.u32 2147483647, %v119
        %vm230 = vcmp.eq.f32.partialorder %v229, 8.507059e+37
        %v231 = vand.u32 %v119, 2147483648
        %v232 = vor.u32 1.1754944e-38, %v231
        %v233 = vsel %vm230, %v232, %v228
        %v234 = vmul.f32 %v219, %v233
        %vm235 = vweird.f32 %v119
        %v236 = vsel %vm235, %v219, %v234
        %237 = vst [vmem:[%s108] sm:$0xff] %v236
        %s238 = sand.u32 %s8, 1
        %s239 = sand.u32 %s8, 1
        %s240 = smul.addr %s239, 8
        %s241 = scalar_lea.vmem [#allocation1], %s240
        %s242 = sadd.s32 %s17, %s16
        %s243 = sadd.s32 %s242, %s15
        %s244 = sadd.s32 %s243, %s14
        %s245 = smul.addr %s244, 8
        %s246 = scalar_lea.vmem %s1, %s245
        // Predicated region
        $region55: #{custom-call.10} parent=53 // pred_check
          _
        $region56: #{custom-call.10} parent=53 // pred_check_branch
          %248 = sbr.rel (0) target = $region58
        $region57: #{custom-call.10} parent=53 // pred_region
          // Predicated region
          $region59: #{custom-call.10} parent=57 // pred_check
            _
          $region60: #{custom-call.10} parent=57 // pred_check_branch
            %250 = sbr.rel (0) target = $region62
          $region61: #{custom-call.10} parent=57 // pred_region
            // Predicated region
            $region74: #{custom-call.10} parent=61 // pred_check
              _
            $region75: #{custom-call.10} parent=61 // pred_check_branch
              %266 = sbr.rel (0) target = $region77
            $region76: #{custom-call.10} parent=61 // pred_region
              loop: start=0, step=1, limit=1
              $region78: #{custom-call.10} parent=76 // loop_pre_header
                _
              $region79: #{custom-call.10} parent=76 // loop_header
                %s268 = sphi 0, %s272
                %p269 = scmp.ge.s32.totalorder %s268, 1
                %s273 = sphi %s241, %s241
                %s274 = sphi %s246, %s246
              $region80: #{custom-call.10} parent=76 // loop_header_branch
                %271 = sbr.rel (%p269) target = $region84
              $region81: #{custom-call.10} parent=76 // loop_body
                %v275 = vld [vmem:[%s273] sm:$0xff]
                %276 = vst [vmem:[%s274] sm:$0xff] %v275
              $region82: #{custom-call.10} parent=76 // loop_footer
                %s272 = sadd.s32 1, %s268
              $region83: #{custom-call.10} parent=76 // loop_footer_branch
                %267 = sbr.rel target = $region79
              $region84: #{custom-call.10} parent=76 // loop_exit
                _
            $region77: #{custom-call.10} parent=61 // pred_fallthru
              _
            // Predicated region
            $region85: #{custom-call.10} parent=61 // pred_check
              _
            $region86: #{custom-call.10} parent=61 // pred_check_branch
              %278 = sbr.rel target = $region88
            $region87: #{custom-call.10} parent=61 // pred_region
              _
            $region88: #{custom-call.10} parent=61 // pred_fallthru
              _
          $region62: #{custom-call.10} parent=57 // pred_fallthru
            _
          // Predicated region
          $region63: #{custom-call.10} parent=57 // pred_check
            _
          $region64: #{custom-call.10} parent=57 // pred_check_branch
            %252 = sbr.rel target = $region66
          $region65: #{custom-call.10} parent=57 // pred_region
            %s254 = ssub.s32 256, 1
            loop: start=0, step=1, limit=1
            $region67: #{custom-call.10} parent=65 // loop_pre_header
              _
            $region68: #{custom-call.10} parent=65 // loop_header
              %s256 = sphi 0, %s260
              %p257 = scmp.ge.s32.totalorder %s256, 1
              %s261 = sphi %s241, %s241
              %s262 = sphi %s246, %s246
            $region69: #{custom-call.10} parent=65 // loop_header_branch
              %259 = sbr.rel (%p257) target = $region73
            $region70: #{custom-call.10} parent=65 // loop_body
              %v263 = vld [vmem:[%s261] sm:%s254]
              %264 = vst [vmem:[%s262] sm:%s254] %v263
            $region71: #{custom-call.10} parent=65 // loop_footer
              %s260 = sadd.s32 1, %s256
            $region72: #{custom-call.10} parent=65 // loop_footer_branch
              %255 = sbr.rel target = $region68
            $region73: #{custom-call.10} parent=65 // loop_exit
              _
          $region66: #{custom-call.10} parent=57 // pred_fallthru
            _
        $region58: #{custom-call.10} parent=53 // pred_fallthru
          _
        %279 = vnop
      $region54: #{custom-call.10} parent=5 // pred_fallthru
        _
      %p280 = scmp.le.s32.totalorder 2, %s3
      // Predicated region
      $region89: #{custom-call.10} parent=5 // pred_check
        %p281 = pneg %p280
      $region90: #{custom-call.10} parent=5 // pred_check_branch
        %283 = sbr.rel (%p281) target = $region92
      $region91: #{custom-call.10} parent=5 // pred_region
        %s284 = ssub.s32 %s3, 2
        %s285 = sand.u32 %s9, 1
        %s286 = sand.u32 %s9, 1
        %s287 = smul.addr %s286, 8
        %s288 = scalar_lea.vmem [#allocation1], %s287
      $region92: #{custom-call.10} parent=5 // pred_fallthru
        _
    $region6: #{custom-call.10} parent=1 // loop_footer
      %s7 = sadd.s32 1, %s3
    $region7: #{custom-call.10} parent=1 // loop_footer_branch
      %2 = sbr.rel target = $region3
    $region8: #{custom-call.10} parent=1 // loop_exit
      _

// kernel: gplayer_forward.1
$region0: #{gplayer_forward.1}
  #allocation0 [shape = 'u32[]', space=smem, size = 0x4, offset = 0x4, fixed_abs, tag = 'smem constant byte address 0x4 - core index']
  #allocation1 [shape = 'u32[72,128]{1,0:T(1,128)}', space=vmem, size = 0x9000, scoped, tag = 'internal scratch']
  %s0 = inlined_call_operand.vmem [shape: f32[2,8,8], index: 0, kind: input, shape index: {}]
  %s1 = inlined_call_operand.vmem [shape: f32[2,8,1024], index: 1, kind: input, shape index: {}]
  %s2 = inlined_call_operand.hbm [shape: f32[2,8,1024], index: 2, kind: output, shape index: {}]
  %s3 = sld [smem:[#allocation0]]
  $region41: #{gplayer_forward.1} parent=0
    _
  %s5 = ssub.s32 1, %s3
  %s6 = scalar_select 0, %s5, %s3
  $region1: #{gplayer_forward.1} parent=0
    #allocation2 [shape = 'u8[65536]{0}', space=vmem, size = 0x10000, scoped, tag = 'output window, operand 0']
    #allocation3 [shape = 's32[2]{0}', space=sflag, size = 0x8, scoped, tag = 'scoped memory for gplayer_forward.1']
    %7 = vsyncpa [#allocation3], 0
    %s8 = scalar_lea.sflag [#allocation3], 1
    %9 = vsyncpa %s8, 0
    loop: start=0, step=1, limit=4
    $region2: #{gplayer_forward.1} parent=1 // loop_pre_header
      _
    $region3: #{gplayer_forward.1} parent=1 // loop_header
      %s11 = sphi 0, %s15
      %p12 = scmp.ge.s32.totalorder %s11, 4
      %s18 = sphi 0, %s30
      %s19 = sphi 0, %s26
      %s20 = sphi 0, %s18
      %s21 = sphi 0, %s19
      %s22 = sphi 0, %s20
      %s23 = sphi 0, %s21
      %s33 = sphi 0, %s35
      %s36 = sphi 0, %s33
      %s37 = sphi 0, %s36
      %s53 = sphi 0, %s37
      %s61 = sphi 0, %s63
      %s64 = sphi 0, %s61
      %s65 = sphi 0, %s64
      %s81 = sphi 0, %s65
      %s89 = sphi 0, %s91
      %s92 = sphi 0, %s89
      %s93 = sphi 0, %s92
      %s109 = sphi 0, %s93
    $region4: #{gplayer_forward.1} parent=1 // loop_header_branch
      %14 = sbr.rel (%p12) target = $region8
    $region5: #{gplayer_forward.1} parent=1 // loop_body
      %s16 = ssub.s32 %s11, 1
      %s17 = ssub.s32 %s11, 2
      %s24 = sadd.s32 1, %s19
      %p25 = scmp.ge.s32.totalorder %s24, 1
      %s26 = scalar_select %p25, 0, %s24
      %s27 = sadd.s32 1, %s18
      %s28 = scalar_select %p25, %s27, %s18
      %p29 = scmp.ge.s32.totalorder %s28, 2
      %s30 = scalar_select %p29, 0, %s28
      %s31 = ssub.s32 %s18, %s30
      %p32 = scmp.eq.s32.totalorder %s31, 0
      %s34 = sadd.s32 %s33, 1
      %s35 = scalar_select %p32, %s33, %s34
      %p38 = pneg %p32
      %p39 = scmp.eq.s32.totalorder %s11, 1
      %p40 = por %p38, %p39
      %p41 = scmp.ne.s32.totalorder %s33, %s36
      %p42 = scmp.eq.s32.totalorder %s11, 0
      %p43 = por %p41, %p42
      %p44 = scmp.ne.s32.totalorder %s33, %s36
      %p45 = scmp.eq.s32.totalorder %s16, 1
      %p46 = por %p44, %p45
      %p47 = scmp.ne.s32.totalorder %s36, %s37
      %p48 = scmp.eq.s32.totalorder %s16, 0
      %p49 = por %p47, %p48
      %p50 = scmp.ne.s32.totalorder %s36, %s37
      %p51 = scmp.eq.s32.totalorder %s17, 1
      %p52 = por %p50, %p51
      %p54 = scmp.ne.s32.totalorder %s37, %s53
      %p55 = scmp.eq.s32.totalorder %s17, 0
      %p56 = por %p54, %p55
      %s57 = ssub.s32 %s18, %s30
      %s58 = ssub.s32 %s19, %s26
      %s59 = sor.u32 %s57, %s58
      %p60 = scmp.eq.s32.totalorder %s59, 0
      %s62 = sadd.s32 %s61, 1
      %s63 = scalar_select %p60, %s61, %s62
      %p66 = pneg %p60
      %p67 = scmp.eq.s32.totalorder %s11, 1
      %p68 = por %p66, %p67
      %p69 = scmp.ne.s32.totalorder %s61, %s64
      %p70 = scmp.eq.s32.totalorder %s11, 0
      %p71 = por %p69, %p70
      %p72 = scmp.ne.s32.totalorder %s61, %s64
      %p73 = scmp.eq.s32.totalorder %s16, 1
      %p74 = por %p72, %p73
      %p75 = scmp.ne.s32.totalorder %s64, %s65
      %p76 = scmp.eq.s32.totalorder %s16, 0
      %p77 = por %p75, %p76
      %p78 = scmp.ne.s32.totalorder %s64, %s65
      %p79 = scmp.eq.s32.totalorder %s17, 1
      %p80 = por %p78, %p79
      %p82 = scmp.ne.s32.totalorder %s65, %s81
      %p83 = scmp.eq.s32.totalorder %s17, 0
      %p84 = por %p82, %p83
      %s85 = ssub.s32 %s18, %s30
      %s86 = ssub.s32 %s19, %s26
      %s87 = sor.u32 %s85, %s86
      %p88 = scmp.eq.s32.totalorder %s87, 0
      %s90 = sadd.s32 %s89, 1
      %s91 = scalar_select %p88, %s89, %s90
      %p94 = pneg %p88
      %p95 = scmp.eq.s32.totalorder %s11, 1
      %p96 = por %p94, %p95
      %p97 = scmp.ne.s32.totalorder %s89, %s92
      %p98 = scmp.eq.s32.totalorder %s11, 0
      %p99 = por %p97, %p98
      %p100 = scmp.ne.s32.totalorder %s89, %s92
      %p101 = scmp.eq.s32.totalorder %s16, 1
      %p102 = por %p100, %p101
      %p103 = scmp.ne.s32.totalorder %s92, %s93
      %p104 = scmp.eq.s32.totalorder %s16, 0
      %p105 = por %p103, %p104
      %p106 = scmp.ne.s32.totalorder %s92, %s93
      %p107 = scmp.eq.s32.totalorder %s17, 1
      %p108 = por %p106, %p107
      %p110 = scmp.ne.s32.totalorder %s93, %s109
      %p111 = scmp.eq.s32.totalorder %s17, 0
      %p112 = por %p110, %p111
      %p113 = scmp.le.s32.totalorder 1, %s11
      %p114 = scmp.lt.s32.totalorder %s11, 3
      %p115 = pnand %p113, %p114
      %p116 = pneg %p115
      // Predicated region
      $region9: #{gplayer_forward.1} parent=5 // pred_check
        _
      $region10: #{gplayer_forward.1} parent=5 // pred_check_branch
        %118 = sbr.rel (%p115) target = $region12
      $region11: #{gplayer_forward.1} parent=5 // pred_region
        %s119 = ssub.s32 %s11, 1
      $region12: #{gplayer_forward.1} parent=5 // pred_fallthru
        _
      %p120 = scmp.lt.s32.totalorder %s11, 2
      // Predicated region
      $region13: #{gplayer_forward.1} parent=5 // pred_check
        %p121 = pneg %p120
      $region14: #{gplayer_forward.1} parent=5 // pred_check_branch
        %123 = sbr.rel (%p121) target = $region16
      $region15: #{gplayer_forward.1} parent=5 // pred_region
        // Predicated region
        $region17: #{gplayer_forward.1} parent=15 // pred_check
          %p124 = pneg %p43
        $region18: #{gplayer_forward.1} parent=15 // pred_check_branch
          %126 = sbr.rel (%p124) target = $region20
        $region19: #{gplayer_forward.1} parent=15 // pred_region
          %p127 = scmp.lt.s32.totalorder %s18, 1
          %s128 = scalar_select %p127, %s18, 1
          %s129 = smul.addr %s128, 8
          %s130 = scalar_lea.vmem %s0, %s129
        $region20: #{gplayer_forward.1} parent=15 // pred_fallthru
          _
        // Predicated region
        $region21: #{gplayer_forward.1} parent=15 // pred_check
          %p131 = pneg %p71
        $region22: #{gplayer_forward.1} parent=15 // pred_check_branch
          %133 = sbr.rel (%p131) target = $region24
        $region23: #{gplayer_forward.1} parent=15 // pred_region
          %s134 = smul.u32 8, %s19
          %p135 = scmp.lt.s32.totalorder %s18, 1
          %s136 = scalar_select %p135, %s18, 1
          %p137 = scmp.lt.s32.totalorder %s134, 7
          %s138 = scalar_select %p137, %s134, 7
          %s139 = smul.addr %s136, 8
          %s140 = sadd.s32 %s138, %s139
          %s141 = smul.addr %s140, 8
          %s142 = scalar_lea.vmem %s1, %s141
          %s143 = smul.u32 8, %s19
        $region24: #{gplayer_forward.1} parent=15 // pred_fallthru
          _
      $region16: #{gplayer_forward.1} parent=5 // pred_fallthru
        _
      %p144 = scmp.le.s32.totalorder 1, %s11
      %p145 = scmp.lt.s32.totalorder %s11, 3
      %p146 = pnand %p144, %p145
      %p147 = pneg %p146
      // Predicated region
      $region25: #{gplayer_forward.1} parent=5 // pred_check
        _
      $region26: #{gplayer_forward.1} parent=5 // pred_check_branch
        %149 = sbr.rel (%p146) target = $region28
      $region27: #{gplayer_forward.1} parent=5 // pred_region
        %s150 = ssub.s32 %s11, 1
        %p151 = scmp.lt.s32.totalorder %s20, 1
        %s152 = scalar_select %p151, %s20, 1
        %s153 = smul.addr %s152, 8
        %s154 = scalar_lea.vmem %s0, %s153
        %p155 = pneg %p49
        %p156 = pneg %p46
        %s157 = smul.u32 8, %s21
        %p158 = scmp.lt.s32.totalorder %s20, 1
        %s159 = scalar_select %p158, %s20, 1
        %p160 = scmp.lt.s32.totalorder %s157, 7
        %s161 = scalar_select %p160, %s157, 7
        %s162 = smul.addr %s159, 8
        %s163 = sadd.s32 %s161, %s162
        %s164 = smul.addr %s163, 8
        %s165 = scalar_lea.vmem %s1, %s164
        %p166 = pneg %p77
        %p167 = pneg %p74
        %p168 = pneg %p105
        %p169 = pneg %p102
        %s170 = sand.u32 %s92, 1
        %s171 = scalar_lea.sflag [#allocation3], %s170
        %s172 = sand.u32 %s92, 1
        %s173 = smul.addr %s172, 64
        %s174 = scalar_lea.vmem [#allocation2], %s173
        %p175 = scmp.lt.s32.totalorder %s20, 1
        %s176 = scalar_select %p175, %s20, 1
        %s177 = smul.addr %s176, 8
        %s178 = scalar_lea.vmem %s0, %s177
        %s179 = smul.u32 8, %s21
        %p180 = scmp.lt.s32.totalorder %s20, 1
        %s181 = scalar_select %p180, %s20, 1
        %p182 = scmp.lt.s32.totalorder %s179, 7
        %s183 = scalar_select %p182, %s179, 7
        %s184 = smul.addr %s181, 8
        %s185 = sadd.s32 %s183, %s184
        %s186 = smul.addr %s185, 8
        %s187 = scalar_lea.vmem %s1, %s186
        %s188 = smul.u32 8, %s21
        %s189 = smul.u32 8, %s21
        %v190 = vld [vmem:[%s178] sm:$0xff]
        %v191 = vld [vmem:[%s187] sm:$0xff]
        %v192 = vld [vmem:[%s187 + $0x8] sm:$0xff]
        %v193 = vld [vmem:[%s187 + $0x10] sm:$0xff]
        %v194 = vld [vmem:[%s187 + $0x18] sm:$0xff]
        %v195 = vld [vmem:[%s187 + $0x20] sm:$0xff]
        %v196 = vld [vmem:[%s187 + $0x28] sm:$0xff]
        %v197 = vld [vmem:[%s187 + $0x30] sm:$0xff]
        %v198 = vld [vmem:[%s187 + $0x38] sm:$0xff]
        %vm199 = vcmask 64512
        %v201 = vsel %vm199, %v190, 0
        %203 = vmatpush.msra.mxu0 0.0
        %204 = vmatpush.msra.mxu0 0.0
        %205 = vmatpush.msra.mxu0 0.0
        %206 = vmatpush.msra.mxu0 0.0
        %207 = vmatpush.msra.mxu0 0.0
        %208 = vmatpush.msra.mxu0 0.0
        %209 = vmatpush.msra.mxu0 0.0
        %210 = vmatpush.msra.mxu0 0.0
        %211 = vmatpush.msra.mxu0 0.0
        %212 = vmatpush.msra.mxu0 0.0
        %213 = vmatpush.msra.mxu0 0.0
        %214 = vmatpush.msra.mxu0 0.0
        %215 = vmatpush.msra.mxu0 0.0
        %216 = vmatpush.msra.mxu0 0.0
        %217 = vmatpush.msra.mxu0 0.0
        %218 = vmatpush.msra.mxu0 %v191
        %219 = vmatmul.f32.gmra.mxu0 %v201
        %v220 = vpop.f32.mrf.mxu0
        %v221 = vadd.f32 0.0, %v220
        %222 = vdwg.mxu0
        %223 = vmatpush.msra.mxu0 0.0
        %224 = vmatpush.msra.mxu0 0.0
        %225 = vmatpush.msra.mxu0 0.0
        %226 = vmatpush.msra.mxu0 0.0
        %227 = vmatpush.msra.mxu0 0.0
        %228 = vmatpush.msra.mxu0 0.0
        %229 = vmatpush.msra.mxu0 0.0
        %230 = vmatpush.msra.mxu0 0.0
        %231 = vmatpush.msra.mxu0 0.0
        %232 = vmatpush.msra.mxu0 0.0
        %233 = vmatpush.msra.mxu0 0.0
        %234 = vmatpush.msra.mxu0 0.0
        %235 = vmatpush.msra.mxu0 0.0
        %236 = vmatpush.msra.mxu0 0.0
        %237 = vmatpush.msra.mxu0 0.0
        %238 = vmatpush.msra.mxu0 %v192
        %239 = vmatmul.f32.gmra.mxu0 %v201
        %v240 = vpop.f32.mrf.mxu0
        %v241 = vadd.f32 0.0, %v240
        %242 = vdwg.mxu0
        %243 = vmatpush.msra.mxu0 0.0
        %244 = vmatpush.msra.mxu0 0.0
        %245 = vmatpush.msra.mxu0 0.0
        %246 = vmatpush.msra.mxu0 0.0
        %247 = vmatpush.msra.mxu0 0.0
        %248 = vmatpush.msra.mxu0 0.0
        %249 = vmatpush.msra.mxu0 0.0
        %250 = vmatpush.msra.mxu0 0.0
        %251 = vmatpush.msra.mxu0 0.0
        %252 = vmatpush.msra.mxu0 0.0
        %253 = vmatpush.msra.mxu0 0.0
        %254 = vmatpush.msra.mxu0 0.0
        %255 = vmatpush.msra.mxu0 0.0
        %256 = vmatpush.msra.mxu0 0.0
        %257 = vmatpush.msra.mxu0 0.0
        %258 = vmatpush.msra.mxu0 %v193
        %259 = vmatmul.f32.gmra.mxu0 %v201
        %v260 = vpop.f32.mrf.mxu0
        %v261 = vadd.f32 0.0, %v260
        %262 = vdwg.mxu0
        %263 = vmatpush.msra.mxu0 0.0
        %264 = vmatpush.msra.mxu0 0.0
        %265 = vmatpush.msra.mxu0 0.0
        %266 = vmatpush.msra.mxu0 0.0
        %267 = vmatpush.msra.mxu0 0.0
        %268 = vmatpush.msra.mxu0 0.0
        %269 = vmatpush.msra.mxu0 0.0
        %270 = vmatpush.msra.mxu0 0.0
        %271 = vmatpush.msra.mxu0 0.0
        %272 = vmatpush.msra.mxu0 0.0
        %273 = vmatpush.msra.mxu0 0.0
        %274 = vmatpush.msra.mxu0 0.0
        %275 = vmatpush.msra.mxu0 0.0
        %276 = vmatpush.msra.mxu0 0.0
        %277 = vmatpush.msra.mxu0 0.0
        %278 = vmatpush.msra.mxu0 %v194
        %279 = vmatmul.f32.gmra.mxu0 %v201
        %v280 = vpop.f32.mrf.mxu0
        %v281 = vadd.f32 0.0, %v280
        %282 = vdwg.mxu0
        %283 = vmatpush.msra.mxu0 0.0
        %284 = vmatpush.msra.mxu0 0.0
        %285 = vmatpush.msra.mxu0 0.0
        %286 = vmatpush.msra.mxu0 0.0
        %287 = vmatpush.msra.mxu0 0.0
        %288 = vmatpush.msra.mxu0 0.0
        %289 = vmatpush.msra.mxu0 0.0
        %290 = vmatpush.msra.mxu0 0.0
        %291 = vmatpush.msra.mxu0 0.0
        %292 = vmatpush.msra.mxu0 0.0
        %293 = vmatpush.msra.mxu0 0.0
        %294 = vmatpush.msra.mxu0 0.0
        %295 = vmatpush.msra.mxu0 0.0
        %296 = vmatpush.msra.mxu0 0.0
        %297 = vmatpush.msra.mxu0 0.0
        %298 = vmatpush.msra.mxu0 %v195
        %299 = vmatmul.f32.gmra.mxu0 %v201
        %v300 = vpop.f32.mrf.mxu0
        %v301 = vadd.f32 0.0, %v300
        %302 = vdwg.mxu0
        %303 = vmatpush.msra.mxu0 0.0
        %304 = vmatpush.msra.mxu0 0.0
        %305 = vmatpush.msra.mxu0 0.0
        %306 = vmatpush.msra.mxu0 0.0
        %307 = vmatpush.msra.mxu0 0.0
        %308 = vmatpush.msra.mxu0 0.0
        %309 = vmatpush.msra.mxu0 0.0
        %310 = vmatpush.msra.mxu0 0.0
        %311 = vmatpush.msra.mxu0 0.0
        %312 = vmatpush.msra.mxu0 0.0
        %313 = vmatpush.msra.mxu0 0.0
        %314 = vmatpush.msra.mxu0 0.0
        %315 = vmatpush.msra.mxu0 0.0
        %316 = vmatpush.msra.mxu0 0.0
        %317 = vmatpush.msra.mxu0 0.0
        %318 = vmatpush.msra.mxu0 %v196
        %319 = vmatmul.f32.gmra.mxu0 %v201
        %v320 = vpop.f32.mrf.mxu0
        %v321 = vadd.f32 0.0, %v320
        %322 = vdwg.mxu0
        %323 = vmatpush.msra.mxu0 0.0
        %324 = vmatpush.msra.mxu0 0.0
        %325 = vmatpush.msra.mxu0 0.0
        %326 = vmatpush.msra.mxu0 0.0
        %327 = vmatpush.msra.mxu0 0.0
        %328 = vmatpush.msra.mxu0 0.0
        %329 = vmatpush.msra.mxu0 0.0
        %330 = vmatpush.msra.mxu0 0.0
        %331 = vmatpush.msra.mxu0 0.0
        %332 = vmatpush.msra.mxu0 0.0
        %333 = vmatpush.msra.mxu0 0.0
        %334 = vmatpush.msra.mxu0 0.0
        %335 = vmatpush.msra.mxu0 0.0
        %336 = vmatpush.msra.mxu0 0.0
        %337 = vmatpush.msra.mxu0 0.0
        %338 = vmatpush.msra.mxu0 %v197
        %339 = vmatmul.f32.gmra.mxu0 %v201
        %v340 = vpop.f32.mrf.mxu0
        %v341 = vadd.f32 0.0, %v340
        %342 = vdwg.mxu0
        %343 = vmatpush.msra.mxu0 0.0
        %344 = vmatpush.msra.mxu0 0.0
        %345 = vmatpush.msra.mxu0 0.0
        %346 = vmatpush.msra.mxu0 0.0
        %347 = vmatpush.msra.mxu0 0.0
        %348 = vmatpush.msra.mxu0 0.0
        %349 = vmatpush.msra.mxu0 0.0
        %350 = vmatpush.msra.mxu0 0.0
        %351 = vmatpush.msra.mxu0 0.0
        %352 = vmatpush.msra.mxu0 0.0
        %353 = vmatpush.msra.mxu0 0.0
        %354 = vmatpush.msra.mxu0 0.0
        %355 = vmatpush.msra.mxu0 0.0
        %356 = vmatpush.msra.mxu0 0.0
        %357 = vmatpush.msra.mxu0 0.0
        %358 = vmatpush.msra.mxu0 %v198
        %359 = vmatmul.f32.gmra.mxu0 %v201
        %v360 = vpop.f32.mrf.mxu0
        %v361 = vadd.f32 0.0, %v360
        %362 = vdwg.mxu0
        %v363 = vmax.f32 %v221, 0.0
        %v364 = vmax.f32 %v241, 0.0
        %v365 = vmax.f32 %v261, 0.0
        %v366 = vmax.f32 %v281, 0.0
        %v367 = vmax.f32 %v301, 0.0
        %v368 = vmax.f32 %v321, 0.0
        %v369 = vmax.f32 %v341, 0.0
        %v370 = vmax.f32 %v361, 0.0
        %371 = vst [vmem:[%s174] sm:$0xff] %v363
        %372 = vst [vmem:[%s174 + $0x8] sm:$0xff] %v364
        %373 = vst [vmem:[%s174 + $0x10] sm:$0xff] %v365
        %374 = vst [vmem:[%s174 + $0x18] sm:$0xff] %v366
        %375 = vst [vmem:[%s174 + $0x20] sm:$0xff] %v367
        %376 = vst [vmem:[%s174 + $0x28] sm:$0xff] %v368
        %377 = vst [vmem:[%s174 + $0x30] sm:$0xff] %v369
        %378 = vst [vmem:[%s174 + $0x38] sm:$0xff] %v370
        %s379 = sand.u32 %s92, 1
        %s380 = scalar_lea.sflag [#allocation3], %s379
        %s381 = sand.u32 %s92, 1
        %s382 = smul.addr %s381, 64
        %s383 = scalar_lea.vmem [#allocation2], %s382
        // Predicated region
        $region29: #{gplayer_forward.1} parent=27 // pred_check
          %p384 = pneg %p102
        $region30: #{gplayer_forward.1} parent=27 // pred_check_branch
          %386 = sbr.rel (%p384) target = $region32
        $region31: #{gplayer_forward.1} parent=27 // pred_region
          %s387 = smul.u32 8, %s21
          %389 = vsyncadd %s380, 0
          %s390 = smul.addr %s20, 8
          %s391 = sadd.s32 %s387, %s390
          %s392 = smul.addr %s391, 8
          %s393 = scalar_lea.hbm %s2, %s392
          %s395 = sshll.u32 %s383, 4
          %s396 = int_to_ptr.vmem [resolvable:$true] %s395
          %s397 = sshll.u32 %s393, 4
          %s398 = int_to_ptr.hbm [resolvable:$true] %s397
          %400 = dma.vmem_to_hbm [thread:$0]  %s396, 1024, %s398, %s380
        $region32: #{gplayer_forward.1} parent=27 // pred_fallthru
          _
      $region28: #{gplayer_forward.1} parent=5 // pred_fallthru
        _
      %p401 = scmp.le.s32.totalorder 2, %s11
      // Predicated region
      $region33: #{gplayer_forward.1} parent=5 // pred_check
        %p402 = pneg %p401
      $region34: #{gplayer_forward.1} parent=5 // pred_check_branch
        %404 = sbr.rel (%p402) target = $region36
      $region35: #{gplayer_forward.1} parent=5 // pred_region
        %s405 = ssub.s32 %s11, 2
        // Predicated region
        $region37: #{gplayer_forward.1} parent=35 // pred_check
          %p406 = pneg %p108
        $region38: #{gplayer_forward.1} parent=35 // pred_check_branch
          %408 = sbr.rel (%p406) target = $region40
        $region39: #{gplayer_forward.1} parent=35 // pred_region
          %s409 = sand.u32 %s93, 1
          %s410 = scalar_lea.sflag [#allocation3], %s409
          %s411 = sand.u32 %s93, 1
          %s412 = smul.addr %s411, 64
          %s413 = scalar_lea.vmem [#allocation2], %s412
          %415 = dma.done %s410, 1024
        $region40: #{gplayer_forward.1} parent=35 // pred_fallthru
          _
      $region36: #{gplayer_forward.1} parent=5 // pred_fallthru
        _
    $region6: #{gplayer_forward.1} parent=1 // loop_footer
      %s15 = sadd.s32 1, %s11
    $region7: #{gplayer_forward.1} parent=1 // loop_footer_branch
      %10 = sbr.rel target = $region3
    $region8: #{gplayer_forward.1} parent=1 // loop_exit
      _
    %416 = vsyncpa [#allocation3], 1
    %s417 = scalar_lea.sflag [#allocation3], 1
    %418 = vsyncpa %s417, 1

</llo_original>
